<compile_context>
chip_gen: v7x
topology: tpu7x:2x2x1
jax: 0.10.0
libtpu: 0.0.40
codegen_flags: <defaults>
</compile_context>

<pallas_src>
import numpy as np
import jax
import jax.numpy as jnp
from jax import lax
from jax.experimental import pallas as pl
from jax.experimental.pallas import tpu as pltpu

# ------------------------- cfg stand-ins (deterministic) --------------------
FEAT_STRIDE = 16
SCALES = np.array([8.0], dtype=np.float64)
RATIOS = np.array([0.5, 1.0, 2.0], dtype=np.float64)
PRE_NMS_TOP_N = 256
POST_NMS_TOP_N = 64
NMS_THRESH = 0.7
LANE = 128
SUBTILE = 8 * LANE          # pad N so coordinate planes are whole vreg tiles
NS_BLK = 8                  # sublane rows (of 128 lanes) per decode grid step
BS = 8                      # sublane block size for the fused NMS scan
# RPN_MIN_SIZE is read in the reference forward but never used (the
# _filter_boxes call is disabled in that repo), so it is omitted here.


# ------------------------- anchor generation (numpy glue) -------------------
def _whctrs(anchor):
    w = anchor[2] - anchor[0] + 1
    h = anchor[3] - anchor[1] + 1
    x_ctr = anchor[0] + 0.5 * (w - 1)
    y_ctr = anchor[1] + 0.5 * (h - 1)
    return w, h, x_ctr, y_ctr


def _mkanchors(ws, hs, x_ctr, y_ctr):
    ws = ws[:, np.newaxis]
    hs = hs[:, np.newaxis]
    return np.hstack((x_ctr - 0.5 * (ws - 1), y_ctr - 0.5 * (hs - 1),
                      x_ctr + 0.5 * (ws - 1), y_ctr + 0.5 * (hs - 1)))


def _ratio_enum(anchor, ratios):
    w, h, x_ctr, y_ctr = _whctrs(anchor)
    size = w * h
    size_ratios = size / ratios
    ws = np.round(np.sqrt(size_ratios))
    hs = np.round(ws * ratios)
    return _mkanchors(ws, hs, x_ctr, y_ctr)


def _scale_enum(anchor, scales):
    w, h, x_ctr, y_ctr = _whctrs(anchor)
    ws = w * scales
    hs = h * scales
    return _mkanchors(ws, hs, x_ctr, y_ctr)


def generate_anchors(base_size=16, ratios=RATIOS, scales=SCALES):
    base_anchor = np.array([1, 1, base_size, base_size], dtype=np.float64) - 1
    ratio_anchors = _ratio_enum(base_anchor, ratios)
    anchors = np.vstack([_scale_enum(ratio_anchors[i, :], scales)
                         for i in range(ratio_anchors.shape[0])])
    return anchors


BASE_ANCHORS = jnp.asarray(generate_anchors(scales=SCALES, ratios=RATIOS),
                           dtype=jnp.float32)          # (A, 4)
NUM_ANCHORS = BASE_ANCHORS.shape[0]                    # A


# ------------------------- Pallas kernel 1: decode + clip -------------------
# Layout: (B, 4, Ns, 128).  Np is padded to a multiple of 8*128 so every
# per-coordinate (NS_BLK, 128) slab the kernel touches is whole (8, 128) vreg
# tiles and the stores are unmasked lane/sublane-dense.
def decode_clip_kernel(anc_ref, dlt_ref, im_ref, out_ref):
    b = pl.program_id(0)

    ax1 = anc_ref[0]                   # (NS_BLK, 128)
    ay1 = anc_ref[1]
    ax2 = anc_ref[2]
    ay2 = anc_ref[3]

    dx = dlt_ref[0, 0]
    dy = dlt_ref[0, 1]
    dw = dlt_ref[0, 2]
    dh = dlt_ref[0, 3]

    widths = ax2 - ax1 + 1.0
    heights = ay2 - ay1 + 1.0
    ctr_x = ax1 + 0.5 * widths
    ctr_y = ay1 + 0.5 * heights

    pred_ctr_x = dx * widths + ctr_x
    pred_ctr_y = dy * heights + ctr_y
    pred_w = jnp.exp(dw) * widths
    pred_h = jnp.exp(dh) * heights

    x1 = pred_ctr_x - 0.5 * pred_w
    y1 = pred_ctr_y - 0.5 * pred_h
    x2 = pred_ctr_x + 0.5 * pred_w
    y2 = pred_ctr_y + 0.5 * pred_h

    im_h = im_ref[b, 0]
    im_w = im_ref[b, 1]
    out_ref[0, 0] = jnp.clip(x1, 0.0, im_w - 1.0)
    out_ref[0, 1] = jnp.clip(y1, 0.0, im_h - 1.0)
    out_ref[0, 2] = jnp.clip(x2, 0.0, im_w - 1.0)
    out_ref[0, 3] = jnp.clip(y2, 0.0, im_h - 1.0)


def decode_and_clip(anchors_r, deltas_r, im_info):
    """anchors_r: (4, Ns, 128); deltas_r: (B, 4, Ns, 128); im_info: (B, 3)."""
    B, _, Ns, L = deltas_r.shape
    S = Ns // NS_BLK
    return pl.pallas_call(
        decode_clip_kernel,
        out_shape=jax.ShapeDtypeStruct((B, 4, Ns, L), jnp.float32),
        grid=(B, S),
        in_specs=[
            pl.BlockSpec((4, NS_BLK, L), lambda b, s: (0, s, 0)),
            pl.BlockSpec((1, 4, NS_BLK, L), lambda b, s: (b, 0, s, 0)),
            pl.BlockSpec(memory_space=pltpu.MemorySpace.SMEM),
        ],
        out_specs=pl.BlockSpec((1, 4, NS_BLK, L), lambda b, s: (b, 0, s, 0)),
        compiler_params=pltpu.CompilerParams(
            # both axes independent: batch AND Ns chunks shard across v7x's
            # two TensorCores (no effect on v5e/v6e single-TC parts).
            dimension_semantics=("parallel", "parallel")),
    )(anchors_r, deltas_r, im_info)


# ------------------------- Pallas kernel 2: block-fused IoU + greedy NMS ----
def _iou(x1a, y1a, x2a, y2a, area_a, x1b, y1b, x2b, y2b, area_b):
    xx1 = jnp.maximum(x1a, x1b)
    yy1 = jnp.maximum(y1a, y1b)
    xx2 = jnp.minimum(x2a, x2b)
    yy2 = jnp.minimum(y2a, y2b)
    w = jnp.maximum(xx2 - xx1 + 1.0, 0.0)
    h = jnp.maximum(yy2 - yy1 + 1.0, 0.0)
    inter = w * h
    denom = area_a + area_b - inter
    # EUP approximate reciprocal + one Newton step on the (slack) VPU:
    # keeps the divide off the VALU critical path while restoring near-exact
    # IoU so threshold-boundary keep/suppress decisions match the reference.
    r = pl.reciprocal(denom, approx=True)
    r = r * (2.0 - denom * r)
    return inter * r


def nms_kernel(boxes_row_ref, boxes_col_ref, boxes_blk_ref, keep_ref):
    """Fused pairwise-IoU + greedy NMS, row-block formulation (no P x P scratch).

    boxes_row_ref: (1, 4, P)          sorted boxes, coordinate-major (lane = box)
    boxes_col_ref: (1, P, 4)          same boxes, box-major (sublane = box)
    boxes_blk_ref: (1, 4, P//BS, BS)  block-major view of boxes_row (free reshape)
    keep_ref     : (1, 1, P)          float keep mask out {0., 1.}
    """
    P = boxes_row_ref.shape[2]
    nblk = P // BS

    # All-box coordinates in lane orientation (1, P) — 2 vregs each.
    x1r = boxes_row_ref[0, 0:1, :]
    y1r = boxes_row_ref[0, 1:2, :]
    x2r = boxes_row_ref[0, 2:3, :]
    y2r = boxes_row_ref[0, 3:4, :]
    area_r = (x2r - x1r + 1.0) * (y2r - y1r + 1.0)

    lane_row = lax.broadcasted_iota(jnp.int32, (1, P), 1)             # (1, P)
    # diff[r, l] = l - r : comparing against g0 selects lane g0+r for sublane r.
    diff = (lax.broadcasted_iota(jnp.int32, (BS, P), 1)
            - lax.broadcasted_iota(jnp.int32, (BS, P), 0))            # (BS, P)
    sub_col = lax.broadcasted_iota(jnp.int32, (BS, 1), 0)             # (BS, 1)

    def block_body(blk, keep):
        g0 = pl.multiple_of(blk * BS, BS)

        # Block's BS boxes in column orientation (BS, 1): cheap aligned
        # sublane load from the box-major layout (no masked-iota transpose).
        bc = boxes_col_ref[0, pl.ds(g0, BS), :]                       # (BS, 4)
        x1c = bc[:, 0:1]
        y1c = bc[:, 1:2]
        x2c = bc[:, 2:3]
        y2c = bc[:, 3:4]
        area_c = (x2c - x1c + 1.0) * (y2c - y1c + 1.0)                # (BS, 1)

        # (BS, P) IoU slab: block rows vs all P boxes, vreg-resident.
        iou = _iou(x1c, y1c, x2c, y2c, area_c,
                   x1r, y1r, x2r, y2r, area_r)                        # (BS, P)

        # Block's BS boxes in lane orientation (1, BS): dynamic-sublane load
        # from the block-major view (avoids any in-kernel transpose / dynamic
        # lane slicing).  Used only for the tiny (BS, BS) intra-block IoU.
        x1b = boxes_blk_ref[0, 0, pl.ds(blk, 1), :]                   # (1, BS)
        y1b = boxes_blk_ref[0, 1, pl.ds(blk, 1), :]
        x2b = boxes_blk_ref[0, 2, pl.ds(blk, 1), :]
        y2b = boxes_blk_ref[0, 3, pl.ds(blk, 1), :]
        area_b = (x2b - x1b + 1.0) * (y2b - y1b + 1.0)
        intra = _iou(x1c, y1c, x2c, y2c, area_c,
                     x1b, y1b, x2b, y2b, area_b)                      # (BS, BS)

        # Alive bits of the block's 8 rows (suppression from earlier blocks):
        # ONE masked lane-reduce per block instead of one per box.
        keep_col = jnp.sum(jnp.where(diff == g0, keep, 0.0),
                           axis=1, keepdims=True)                     # (BS, 1)

        # Unrolled intra-block greedy scan on vreg-resident data.
        supp = jnp.zeros((1, P), jnp.bool_)
        for r in range(BS):
            alive = keep_col[r:r + 1, :] > 0.5                        # (1, 1)
            supp = supp | ((iou[r:r + 1, :] > NMS_THRESH)
                           & (lane_row > g0 + r) & alive)             # (1, P)
            kill = ((intra[:, r:r + 1] > NMS_THRESH)
                    & (sub_col > r) & alive)                          # (BS, 1)
            keep_col = jnp.where(kill, 0.0, keep_col)

        # One vector update of the global keep mask per block.
        return jnp.where(supp, 0.0, keep)

    keep_final = lax.fori_loop(0, nblk, block_body,
                               jnp.ones((1, P), jnp.float32))
    keep_ref[0] = keep_final


def fused_nms(boxes_row, boxes_col, boxes_blk):
    """boxes_row: (B, 4, P); boxes_col: (B, P, 4); boxes_blk: (B, 4, P//BS, BS)
       -> keep mask (B, 1, P) float32 {0., 1.}."""
    B, _, P = boxes_row.shape
    nblk = P // BS
    return pl.pallas_call(
        nms_kernel,
        out_shape=jax.ShapeDtypeStruct((B, 1, P), jnp.float32),
        grid=(B,),
        in_specs=[
            pl.BlockSpec((1, 4, P), lambda b: (b, 0, 0)),
            pl.BlockSpec((1, P, 4), lambda b: (b, 0, 0)),
            pl.BlockSpec((1, 4, nblk, BS), lambda b: (b, 0, 0, 0)),
        ],
        out_specs=pl.BlockSpec((1, 1, P), lambda b: (b, 0, 0)),
        compiler_params=pltpu.CompilerParams(
            dimension_semantics=("parallel",)),
    )(boxes_row, boxes_col, boxes_blk)


# ------------------------- forward pass --------------------------------------
def proposal_layer_forward(rpn_cls_prob, rpn_bbox_pred, im_info):
    """Inputs follow the PyTorch NCHW convention:
       rpn_cls_prob : (B, 2A, H, W)
       rpn_bbox_pred: (B, 4A, H, W)
       im_info      : (B, 3)  [height, width, scale]
       returns      : (B, POST_NMS_TOP_N, 5)  [batch_idx, x1, y1, x2, y2]
    """
    B, _, H, W = rpn_cls_prob.shape
    A = NUM_ANCHORS
    K = H * W
    N = K * A

    # (a, h, w) flattening order everywhere: the scores need NO transpose at
    # all, and the deltas permute moves contiguous K-length chunks instead of
    # a stride-A element interleave.  Anchors are built in the same order so
    # the (score, delta, anchor) correspondence is unchanged.
    scores = rpn_cls_prob[:, A:, :, :].reshape(B, N)                  # (B, N)
    deltas_t = (rpn_bbox_pred.reshape(B, A, 4, K)
                .transpose(0, 2, 1, 3).reshape(B, 4, N))              # (B, 4, N)

    shift_x = jnp.arange(W, dtype=jnp.float32) * FEAT_STRIDE
    shift_y = jnp.arange(H, dtype=jnp.float32) * FEAT_STRIDE
    sx, sy = jnp.meshgrid(shift_x, shift_y)                           # (H, W)
    shifts = jnp.stack([sx.ravel(), sy.ravel(), sx.ravel(), sy.ravel()],
                       axis=0)                                        # (4, K)
    anchors_t = (BASE_ANCHORS.T[:, :, None]
                 + shifts[:, None, :]).reshape(4, N)                  # (4, N)

    # pad N to a multiple of 8*128 so each coordinate plane in the decode
    # kernel is whole (8, 128) vreg tiles (padded boxes never enter top-k).
    Np = ((N + SUBTILE - 1) // SUBTILE) * SUBTILE
    if Np != N:
        deltas_t = jnp.pad(deltas_t, ((0, 0), (0, 0), (0, Np - N)))
        anchors_t = jnp.pad(anchors_t, ((0, 0), (0, Np - N)))
    Ns = Np // LANE

    # Pallas decode + clip on the sublane/lane-dense layout
    proposals_r = decode_and_clip(anchors_t.reshape(4, Ns, LANE),
                                  deltas_t.reshape(B, 4, Ns, LANE),
                                  im_info.astype(jnp.float32))        # (B,4,Ns,128)
    proposals_t = proposals_r.reshape(B, 4, Np)                       # free reshape

    # sort scores descending, keep pre_nms_topN; gather on axis=2 keeps the
    # coordinate-major layout (no big transpose).
    P = min(PRE_NMS_TOP_N, N) if PRE_NMS_TOP_N > 0 else N
    assert P % BS == 0, "fused NMS processes boxes in sublane blocks of 8"
    # TODO(synk): pad/mask a ragged P (not a multiple of 8) if a config needs it.
    _, order = lax.top_k(scores, P)                                   # (B, P)
    props_sorted = jnp.take_along_axis(proposals_t, order[:, None, :],
                                       axis=2)                        # (B, 4, P)
    props_col = jnp.transpose(props_sorted, (0, 2, 1))                # (B, P, 4) tiny
    props_blk = props_sorted.reshape(B, 4, P // BS, BS)               # free view

    # Pallas block-fused pairwise-IoU + greedy NMS scan -> keep mask.
    # No (P, P) buffer any more, so there is no P^2 VMEM bound to guard.
    keep = fused_nms(props_sorted, props_col, props_blk).reshape(B, P) > 0.5

    # assemble (B, POST_NMS_TOP_N, 5) output (compaction/gather stays in XLA)
    def per_batch(b, props_4p, kp):
        sel = jnp.argsort(jnp.where(kp, 0, 1).astype(jnp.int32),
                          stable=True)[:POST_NMS_TOP_N]
        num_keep = jnp.sum(kp)
        boxes = props_4p[:, sel].T                                    # (topN, 4)
        valid = (jnp.arange(POST_NMS_TOP_N)
                 < jnp.minimum(num_keep, POST_NMS_TOP_N))[:, None]
        boxes = jnp.where(valid, boxes, 0.0)
        bcol = jnp.full((POST_NMS_TOP_N, 1), b, dtype=jnp.float32)
        return jnp.concatenate([bcol, boxes], axis=1)

    output = jax.vmap(per_batch)(jnp.arange(B, dtype=jnp.float32),
                                 props_sorted, keep)
    return output


# ------------------------- demo ----------------------------------------------
if __name__ == "__main__":
    key = jax.random.PRNGKey(0)
    B, H, W = 2, 16, 16
    A = NUM_ANCHORS

    k1, k2 = jax.random.split(key)
    rpn_cls_prob = jax.nn.softmax(
        jax.random.normal(k1, (B, 2 * A, H, W), dtype=jnp.float32), axis=1)
    rpn_bbox_pred = 0.1 * jax.random.normal(
        k2, (B, 4 * A, H, W), dtype=jnp.float32)
    im_info = jnp.array([[H * FEAT_STRIDE, W * FEAT_STRIDE, 1.0],
                         [200.0, 224.0, 1.0]], dtype=jnp.float32)

    out = jax.jit(proposal_layer_forward)(rpn_cls_prob, rpn_bbox_pred, im_info)
    out = jax.block_until_ready(out)

    assert out.shape == (B, POST_NMS_TOP_N, 5)
    assert bool(jnp.all(jnp.isfinite(out)))
    print("KERNEL_OK")
</pallas_src>

<mosaic_0001>
module attributes {stable_mosaic.version = 11 : i64} {
  func.func @decode_clip_kernel(%arg0: i32, %arg1: i32, %arg2: memref<4x8x128xf32, #tpu.memory_space<vmem>>, %arg3: memref<1x4x8x128xf32, #tpu.memory_space<vmem>>, %arg4: memref<2x3xf32, #tpu.memory_space<smem>>, %arg5: memref<1x4x8x128xf32, #tpu.memory_space<vmem>>) attributes {dimension_semantics = [#tpu.dimension_semantics<parallel>, #tpu.dimension_semantics<parallel>], iteration_bounds = array<i64: 2, 1>, scalar_prefetch = 0 : i64, scratch_operands = 0 : i64, tpu.core_type = #tpu.core_type<tc>, window_params = [{transform_indices = @transform_0, window_bounds = array<i64: 4, 8, 128>}, {transform_indices = @transform_1, window_bounds = array<i64: 1, 4, 8, 128>}, {transform_indices = @transform_2, window_bounds = array<i64: 2, 3>}, {transform_indices = @transform_3, window_bounds = array<i64: 1, 4, 8, 128>}]} {
    %c0 = arith.constant 0 : index
    %c0_0 = arith.constant 0 : index
    %c0_1 = arith.constant 0 : index
    %0 = vector.load %arg2[%c0, %c0_0, %c0_1] : memref<4x8x128xf32, #tpu.memory_space<vmem>>, vector<1x8x128xf32>
    %1 = vector.shape_cast %0 : vector<1x8x128xf32> to vector<8x128xf32>
    %c1 = arith.constant 1 : index
    %c0_2 = arith.constant 0 : index
    %c0_3 = arith.constant 0 : index
    %2 = vector.load %arg2[%c1, %c0_2, %c0_3] : memref<4x8x128xf32, #tpu.memory_space<vmem>>, vector<1x8x128xf32>
    %3 = vector.shape_cast %2 : vector<1x8x128xf32> to vector<8x128xf32>
    %c2 = arith.constant 2 : index
    %c0_4 = arith.constant 0 : index
    %c0_5 = arith.constant 0 : index
    %4 = vector.load %arg2[%c2, %c0_4, %c0_5] : memref<4x8x128xf32, #tpu.memory_space<vmem>>, vector<1x8x128xf32>
    %5 = vector.shape_cast %4 : vector<1x8x128xf32> to vector<8x128xf32>
    %c3 = arith.constant 3 : index
    %c0_6 = arith.constant 0 : index
    %c0_7 = arith.constant 0 : index
    %6 = vector.load %arg2[%c3, %c0_6, %c0_7] : memref<4x8x128xf32, #tpu.memory_space<vmem>>, vector<1x8x128xf32>
    %7 = vector.shape_cast %6 : vector<1x8x128xf32> to vector<8x128xf32>
    %c0_8 = arith.constant 0 : index
    %c0_9 = arith.constant 0 : index
    %c0_10 = arith.constant 0 : index
    %c0_11 = arith.constant 0 : index
    %8 = vector.load %arg3[%c0_8, %c0_9, %c0_10, %c0_11] : memref<1x4x8x128xf32, #tpu.memory_space<vmem>>, vector<1x1x8x128xf32>
    %9 = vector.shape_cast %8 : vector<1x1x8x128xf32> to vector<8x128xf32>
    %c0_12 = arith.constant 0 : index
    %c1_13 = arith.constant 1 : index
    %c0_14 = arith.constant 0 : index
    %c0_15 = arith.constant 0 : index
    %10 = vector.load %arg3[%c0_12, %c1_13, %c0_14, %c0_15] : memref<1x4x8x128xf32, #tpu.memory_space<vmem>>, vector<1x1x8x128xf32>
    %11 = vector.shape_cast %10 : vector<1x1x8x128xf32> to vector<8x128xf32>
    %c0_16 = arith.constant 0 : index
    %c2_17 = arith.constant 2 : index
    %c0_18 = arith.constant 0 : index
    %c0_19 = arith.constant 0 : index
    %12 = vector.load %arg3[%c0_16, %c2_17, %c0_18, %c0_19] : memref<1x4x8x128xf32, #tpu.memory_space<vmem>>, vector<1x1x8x128xf32>
    %13 = vector.shape_cast %12 : vector<1x1x8x128xf32> to vector<8x128xf32>
    %c0_20 = arith.constant 0 : index
    %c3_21 = arith.constant 3 : index
    %c0_22 = arith.constant 0 : index
    %c0_23 = arith.constant 0 : index
    %14 = vector.load %arg3[%c0_20, %c3_21, %c0_22, %c0_23] : memref<1x4x8x128xf32, #tpu.memory_space<vmem>>, vector<1x1x8x128xf32>
    %15 = vector.shape_cast %14 : vector<1x1x8x128xf32> to vector<8x128xf32>
    %16 = arith.subf %5, %1 : vector<8x128xf32>
    %cst = arith.constant 1.000000e+00 : f32
    %17 = vector.broadcast %cst : f32 to vector<8x128xf32>
    %18 = arith.addf %16, %17 : vector<8x128xf32>
    %19 = arith.subf %7, %3 : vector<8x128xf32>
    %cst_24 = arith.constant 1.000000e+00 : f32
    %20 = vector.broadcast %cst_24 : f32 to vector<8x128xf32>
    %21 = arith.addf %19, %20 : vector<8x128xf32>
    %cst_25 = arith.constant 5.000000e-01 : f32
    %22 = vector.broadcast %cst_25 : f32 to vector<8x128xf32>
    %23 = arith.mulf %22, %18 : vector<8x128xf32>
    %24 = arith.addf %1, %23 : vector<8x128xf32>
    %cst_26 = arith.constant 5.000000e-01 : f32
    %25 = vector.broadcast %cst_26 : f32 to vector<8x128xf32>
    %26 = arith.mulf %25, %21 : vector<8x128xf32>
    %27 = arith.addf %3, %26 : vector<8x128xf32>
    %28 = arith.mulf %9, %18 : vector<8x128xf32>
    %29 = arith.addf %28, %24 : vector<8x128xf32>
    %30 = arith.mulf %11, %21 : vector<8x128xf32>
    %31 = arith.addf %30, %27 : vector<8x128xf32>
    %32 = math.exp %13 : vector<8x128xf32>
    %33 = arith.mulf %32, %18 : vector<8x128xf32>
    %34 = math.exp %15 : vector<8x128xf32>
    %35 = arith.mulf %34, %21 : vector<8x128xf32>
    %cst_27 = arith.constant 5.000000e-01 : f32
    %36 = vector.broadcast %cst_27 : f32 to vector<8x128xf32>
    %37 = arith.mulf %36, %33 : vector<8x128xf32>
    %38 = arith.subf %29, %37 : vector<8x128xf32>
    %cst_28 = arith.constant 5.000000e-01 : f32
    %39 = vector.broadcast %cst_28 : f32 to vector<8x128xf32>
    %40 = arith.mulf %39, %35 : vector<8x128xf32>
    %41 = arith.subf %31, %40 : vector<8x128xf32>
    %cst_29 = arith.constant 5.000000e-01 : f32
    %42 = vector.broadcast %cst_29 : f32 to vector<8x128xf32>
    %43 = arith.mulf %42, %33 : vector<8x128xf32>
    %44 = arith.addf %29, %43 : vector<8x128xf32>
    %cst_30 = arith.constant 5.000000e-01 : f32
    %45 = vector.broadcast %cst_30 : f32 to vector<8x128xf32>
    %46 = arith.mulf %45, %35 : vector<8x128xf32>
    %47 = arith.addf %31, %46 : vector<8x128xf32>
    %48 = arith.index_cast %arg0 : i32 to index
    %c0_31 = arith.constant 0 : index
    %49 = memref.load %arg4[%48, %c0_31] : memref<2x3xf32, #tpu.memory_space<smem>>
    %50 = arith.index_cast %arg0 : i32 to index
    %c1_32 = arith.constant 1 : index
    %51 = memref.load %arg4[%50, %c1_32] : memref<2x3xf32, #tpu.memory_space<smem>>
    %cst_33 = arith.constant 1.000000e+00 : f32
    %52 = arith.subf %51, %cst_33 : f32
    %cst_34 = arith.constant 0.000000e+00 : f32
    %53 = vector.broadcast %cst_34 : f32 to vector<8x128xf32>
    %54 = arith.maximumf %53, %38 : vector<8x128xf32>
    %55 = vector.broadcast %52 : f32 to vector<8x128xf32>
    %56 = arith.minimumf %55, %54 : vector<8x128xf32>
    %c0_35 = arith.constant 0 : index
    %c0_36 = arith.constant 0 : index
    %c0_37 = arith.constant 0 : index
    %c0_38 = arith.constant 0 : index
    %57 = vector.load %arg5[%c0_35, %c0_36, %c0_37, %c0_38] : memref<1x4x8x128xf32, #tpu.memory_space<vmem>>, vector<1x1x8x128xf32>
    %58 = vector.shape_cast %57 : vector<1x1x8x128xf32> to vector<8x128xf32>
    %59 = vector.shape_cast %56 : vector<8x128xf32> to vector<1x1x8x128xf32>
    tpu.vector_store %arg5[%c0_35, %c0_36, %c0_37, %c0_38], %59 {strides = array<i32>} : memref<1x4x8x128xf32, #tpu.memory_space<vmem>>, vector<1x1x8x128xf32>,
    %cst_39 = arith.constant 1.000000e+00 : f32
    %60 = arith.subf %49, %cst_39 : f32
    %cst_40 = arith.constant 0.000000e+00 : f32
    %61 = vector.broadcast %cst_40 : f32 to vector<8x128xf32>
    %62 = arith.maximumf %61, %41 : vector<8x128xf32>
    %63 = vector.broadcast %60 : f32 to vector<8x128xf32>
    %64 = arith.minimumf %63, %62 : vector<8x128xf32>
    %c0_41 = arith.constant 0 : index
    %c1_42 = arith.constant 1 : index
    %c0_43 = arith.constant 0 : index
    %c0_44 = arith.constant 0 : index
    %65 = vector.load %arg5[%c0_41, %c1_42, %c0_43, %c0_44] : memref<1x4x8x128xf32, #tpu.memory_space<vmem>>, vector<1x1x8x128xf32>
    %66 = vector.shape_cast %65 : vector<1x1x8x128xf32> to vector<8x128xf32>
    %67 = vector.shape_cast %64 : vector<8x128xf32> to vector<1x1x8x128xf32>
    tpu.vector_store %arg5[%c0_41, %c1_42, %c0_43, %c0_44], %67 {strides = array<i32>} : memref<1x4x8x128xf32, #tpu.memory_space<vmem>>, vector<1x1x8x128xf32>,
    %cst_45 = arith.constant 1.000000e+00 : f32
    %68 = arith.subf %51, %cst_45 : f32
    %cst_46 = arith.constant 0.000000e+00 : f32
    %69 = vector.broadcast %cst_46 : f32 to vector<8x128xf32>
    %70 = arith.maximumf %69, %44 : vector<8x128xf32>
    %71 = vector.broadcast %68 : f32 to vector<8x128xf32>
    %72 = arith.minimumf %71, %70 : vector<8x128xf32>
    %c0_47 = arith.constant 0 : index
    %c2_48 = arith.constant 2 : index
    %c0_49 = arith.constant 0 : index
    %c0_50 = arith.constant 0 : index
    %73 = vector.load %arg5[%c0_47, %c2_48, %c0_49, %c0_50] : memref<1x4x8x128xf32, #tpu.memory_space<vmem>>, vector<1x1x8x128xf32>
    %74 = vector.shape_cast %73 : vector<1x1x8x128xf32> to vector<8x128xf32>
    %75 = vector.shape_cast %72 : vector<8x128xf32> to vector<1x1x8x128xf32>
    tpu.vector_store %arg5[%c0_47, %c2_48, %c0_49, %c0_50], %75 {strides = array<i32>} : memref<1x4x8x128xf32, #tpu.memory_space<vmem>>, vector<1x1x8x128xf32>,
    %cst_51 = arith.constant 1.000000e+00 : f32
    %76 = arith.subf %49, %cst_51 : f32
    %cst_52 = arith.constant 0.000000e+00 : f32
    %77 = vector.broadcast %cst_52 : f32 to vector<8x128xf32>
    %78 = arith.maximumf %77, %47 : vector<8x128xf32>
    %79 = vector.broadcast %76 : f32 to vector<8x128xf32>
    %80 = arith.minimumf %79, %78 : vector<8x128xf32>
    %c0_53 = arith.constant 0 : index
    %c3_54 = arith.constant 3 : index
    %c0_55 = arith.constant 0 : index
    %c0_56 = arith.constant 0 : index
    %81 = vector.load %arg5[%c0_53, %c3_54, %c0_55, %c0_56] : memref<1x4x8x128xf32, #tpu.memory_space<vmem>>, vector<1x1x8x128xf32>
    %82 = vector.shape_cast %81 : vector<1x1x8x128xf32> to vector<8x128xf32>
    %83 = vector.shape_cast %80 : vector<8x128xf32> to vector<1x1x8x128xf32>
    tpu.vector_store %arg5[%c0_53, %c3_54, %c0_55, %c0_56], %83 {strides = array<i32>} : memref<1x4x8x128xf32, #tpu.memory_space<vmem>>, vector<1x1x8x128xf32>,
    return
  }
  func.func @transform_0(%arg0: i32, %arg1: i32) -> (i32, i32, i32) {
    %c0_i32 = arith.constant 0 : i32
    %c0_i32_0 = arith.constant 0 : i32
    %c0_i32_1 = arith.constant 0 : i32
    return %c0_i32, %arg1, %c0_i32_0 : i32, i32, i32
  }
  func.func @transform_1(%arg0: i32, %arg1: i32) -> (i32, i32, i32, i32) {
    %c0_i32 = arith.constant 0 : i32
    %c0_i32_0 = arith.constant 0 : i32
    %c0_i32_1 = arith.constant 0 : i32
    return %arg0, %c0_i32, %arg1, %c0_i32_0 : i32, i32, i32, i32
  }
  func.func @transform_2(%arg0: i32, %arg1: i32) -> (i32, i32) {
    %c0_i32 = arith.constant 0 : i32
    %c0_i32_0 = arith.constant 0 : i32
    %c0_i32_1 = arith.constant 0 : i32
    return %c0_i32, %c0_i32_0 : i32, i32
  }
  func.func @transform_3(%arg0: i32, %arg1: i32) -> (i32, i32, i32, i32) {
    %c0_i32 = arith.constant 0 : i32
    %c0_i32_0 = arith.constant 0 : i32
    %c0_i32_1 = arith.constant 0 : i32
    return %arg0, %c0_i32, %arg1, %c0_i32_0 : i32, i32, i32, i32
  }
}

module attributes {stable_mosaic.version = 11 : i64} {
  func.func @nms_kernel(%arg0: i32, %arg1: memref<1x4x256xf32, #tpu.memory_space<vmem>>, %arg2: memref<1x256x4xf32, #tpu.memory_space<vmem>>, %arg3: memref<1x4x32x8xf32, #tpu.memory_space<vmem>>, %arg4: memref<1x1x256xf32, #tpu.memory_space<vmem>>) attributes {dimension_semantics = [#tpu.dimension_semantics<parallel>], iteration_bounds = array<i64: 2>, scalar_prefetch = 0 : i64, scratch_operands = 0 : i64, tpu.core_type = #tpu.core_type<tc>, window_params = [{transform_indices = @transform_0, window_bounds = array<i64: 1, 4, 256>}, {transform_indices = @transform_1, window_bounds = array<i64: 1, 256, 4>}, {transform_indices = @transform_2, window_bounds = array<i64: 1, 4, 32, 8>}, {transform_indices = @transform_3, window_bounds = array<i64: 1, 1, 256>}]} {
    %c0 = arith.constant 0 : index
    %c0_0 = arith.constant 0 : index
    %c0_1 = arith.constant 0 : index
    %0 = vector.load %arg1[%c0, %c0_0, %c0_1] : memref<1x4x256xf32, #tpu.memory_space<vmem>>, vector<1x1x256xf32>
    %1 = vector.shape_cast %0 : vector<1x1x256xf32> to vector<1x256xf32>
    %c0_2 = arith.constant 0 : index
    %c1 = arith.constant 1 : index
    %c0_3 = arith.constant 0 : index
    %2 = vector.load %arg1[%c0_2, %c1, %c0_3] : memref<1x4x256xf32, #tpu.memory_space<vmem>>, vector<1x1x256xf32>
    %3 = vector.shape_cast %2 : vector<1x1x256xf32> to vector<1x256xf32>
    %c0_4 = arith.constant 0 : index
    %c2 = arith.constant 2 : index
    %c0_5 = arith.constant 0 : index
    %4 = vector.load %arg1[%c0_4, %c2, %c0_5] : memref<1x4x256xf32, #tpu.memory_space<vmem>>, vector<1x1x256xf32>
    %5 = vector.shape_cast %4 : vector<1x1x256xf32> to vector<1x256xf32>
    %c0_6 = arith.constant 0 : index
    %c3 = arith.constant 3 : index
    %c0_7 = arith.constant 0 : index
    %6 = vector.load %arg1[%c0_6, %c3, %c0_7] : memref<1x4x256xf32, #tpu.memory_space<vmem>>, vector<1x1x256xf32>
    %7 = vector.shape_cast %6 : vector<1x1x256xf32> to vector<1x256xf32>
    %8 = arith.subf %5, %1 : vector<1x256xf32>
    %cst = arith.constant 1.000000e+00 : f32
    %9 = vector.broadcast %cst : f32 to vector<1x256xf32>
    %10 = arith.addf %8, %9 : vector<1x256xf32>
    %11 = arith.subf %7, %3 : vector<1x256xf32>
    %cst_8 = arith.constant 1.000000e+00 : f32
    %12 = vector.broadcast %cst_8 : f32 to vector<1x256xf32>
    %13 = arith.addf %11, %12 : vector<1x256xf32>
    %14 = arith.mulf %10, %13 : vector<1x256xf32>
    %15 = tpu.iota {dimensions = array<i32: 1>} : vector<1x256xi32>
    %16 = tpu.iota {dimensions = array<i32: 1>} : vector<8x256xi32>
    %17 = tpu.iota {dimensions = array<i32: 0>} : vector<8x256xi32>
    %18 = arith.subi %16, %17 : vector<8x256xi32>
    %19 = tpu.iota {dimensions = array<i32: 0>} : vector<8x1xi32>
    %cst_9 = arith.constant 1.000000e+00 : f32
    %20 = vector.broadcast %cst_9 : f32 to vector<1x256xf32>
    %c0_i32 = arith.constant 0 : i32
    %c32_i32 = arith.constant 32 : i32
    %21 = arith.addi %c0_i32, %c32_i32 : i32
    %c1_i32 = arith.constant 1 : i32
    %22 = scf.for %arg5 = %c0_i32 to %21 step %c1_i32 iter_args(%arg6 = %20) -> (vector<1x256xf32>)  : i32 {
      %c8_i32 = arith.constant 8 : i32
      %26 = arith.muli %arg5, %c8_i32 : i32
      %27 = tpu.assume_multiple %26, 8 : i32
      %c0_14 = arith.constant 0 : index
      %28 = arith.index_cast %27 : i32 to index
      %c0_15 = arith.constant 0 : index
      %29 = vector.load %arg2[%c0_14, %28, %c0_15] : memref<1x256x4xf32, #tpu.memory_space<vmem>>, vector<1x8x4xf32>
      %30 = vector.shape_cast %29 : vector<1x8x4xf32> to vector<8x4xf32>
      %31 = vector.extract_strided_slice %30 {offsets = [0, 0], sizes = [8, 1], strides = [1, 1]} : vector<8x4xf32> to vector<8x1xf32>
      %32 = vector.extract_strided_slice %30 {offsets = [0, 1], sizes = [8, 1], strides = [1, 1]} : vector<8x4xf32> to vector<8x1xf32>
      %33 = vector.extract_strided_slice %30 {offsets = [0, 2], sizes = [8, 1], strides = [1, 1]} : vector<8x4xf32> to vector<8x1xf32>
      %34 = vector.extract_strided_slice %30 {offsets = [0, 3], sizes = [8, 1], strides = [1, 1]} : vector<8x4xf32> to vector<8x1xf32>
      %35 = arith.subf %33, %31 : vector<8x1xf32>
      %cst_16 = arith.constant 1.000000e+00 : f32
      %36 = vector.broadcast %cst_16 : f32 to vector<8x1xf32>
      %37 = arith.addf %35, %36 : vector<8x1xf32>
      %38 = arith.subf %34, %32 : vector<8x1xf32>
      %cst_17 = arith.constant 1.000000e+00 : f32
      %39 = vector.broadcast %cst_17 : f32 to vector<8x1xf32>
      %40 = arith.addf %38, %39 : vector<8x1xf32>
      %41 = arith.mulf %37, %40 : vector<8x1xf32>
      %42 = vector.broadcast %31 : vector<8x1xf32> to vector<8x256xf32>
      %43 = vector.broadcast %1 : vector<1x256xf32> to vector<8x256xf32>
      %44 = arith.maximumf %42, %43 : vector<8x256xf32>
      %45 = vector.broadcast %32 : vector<8x1xf32> to vector<8x256xf32>
      %46 = vector.broadcast %3 : vector<1x256xf32> to vector<8x256xf32>
      %47 = arith.maximumf %45, %46 : vector<8x256xf32>
      %48 = vector.broadcast %33 : vector<8x1xf32> to vector<8x256xf32>
      %49 = vector.broadcast %5 : vector<1x256xf32> to vector<8x256xf32>
      %50 = arith.minimumf %48, %49 : vector<8x256xf32>
      %51 = vector.broadcast %34 : vector<8x1xf32> to vector<8x256xf32>
      %52 = vector.broadcast %7 : vector<1x256xf32> to vector<8x256xf32>
      %53 = arith.minimumf %51, %52 : vector<8x256xf32>
      %54 = arith.subf %50, %44 : vector<8x256xf32>
      %cst_18 = arith.constant 1.000000e+00 : f32
      %55 = vector.broadcast %cst_18 : f32 to vector<8x256xf32>
      %56 = arith.addf %54, %55 : vector<8x256xf32>
      %cst_19 = arith.constant 0.000000e+00 : f32
      %57 = vector.broadcast %cst_19 : f32 to vector<8x256xf32>
      %58 = arith.maximumf %56, %57 : vector<8x256xf32>
      %59 = arith.subf %53, %47 : vector<8x256xf32>
      %cst_20 = arith.constant 1.000000e+00 : f32
      %60 = vector.broadcast %cst_20 : f32 to vector<8x256xf32>
      %61 = arith.addf %59, %60 : vector<8x256xf32>
      %cst_21 = arith.constant 0.000000e+00 : f32
      %62 = vector.broadcast %cst_21 : f32 to vector<8x256xf32>
      %63 = arith.maximumf %61, %62 : vector<8x256xf32>
      %64 = arith.mulf %58, %63 : vector<8x256xf32>
      %65 = vector.broadcast %41 : vector<8x1xf32> to vector<8x256xf32>
      %66 = vector.broadcast %14 : vector<1x256xf32> to vector<8x256xf32>
      %67 = arith.addf %65, %66 : vector<8x256xf32>
      %68 = arith.subf %67, %64 : vector<8x256xf32>
      %69 = tpu.reciprocal %68 {approx = true} : vector<8x256xf32> -> vector<8x256xf32>
      %70 = arith.mulf %68, %69 : vector<8x256xf32>
      %cst_22 = arith.constant 2.000000e+00 : f32
      %71 = vector.broadcast %cst_22 : f32 to vector<8x256xf32>
      %72 = arith.subf %71, %70 : vector<8x256xf32>
      %73 = arith.mulf %69, %72 : vector<8x256xf32>
      %74 = arith.mulf %64, %73 : vector<8x256xf32>
      %c0_23 = arith.constant 0 : index
      %c0_24 = arith.constant 0 : index
      %75 = arith.index_cast %arg5 : i32 to index
      %c0_25 = arith.constant 0 : index
      %76 = vector.load %arg3[%c0_23, %c0_24, %75, %c0_25] : memref<1x4x32x8xf32, #tpu.memory_space<vmem>>, vector<1x1x1x8xf32>
      %77 = vector.shape_cast %76 : vector<1x1x1x8xf32> to vector<1x8xf32>
      %c0_26 = arith.constant 0 : index
      %c1_27 = arith.constant 1 : index
      %78 = arith.index_cast %arg5 : i32 to index
      %c0_28 = arith.constant 0 : index
      %79 = vector.load %arg3[%c0_26, %c1_27, %78, %c0_28] : memref<1x4x32x8xf32, #tpu.memory_space<vmem>>, vector<1x1x1x8xf32>
      %80 = vector.shape_cast %79 : vector<1x1x1x8xf32> to vector<1x8xf32>
      %c0_29 = arith.constant 0 : index
      %c2_30 = arith.constant 2 : index
      %81 = arith.index_cast %arg5 : i32 to index
      %c0_31 = arith.constant 0 : index
      %82 = vector.load %arg3[%c0_29, %c2_30, %81, %c0_31] : memref<1x4x32x8xf32, #tpu.memory_space<vmem>>, vector<1x1x1x8xf32>
      %83 = vector.shape_cast %82 : vector<1x1x1x8xf32> to vector<1x8xf32>
      %c0_32 = arith.constant 0 : index
      %c3_33 = arith.constant 3 : index
      %84 = arith.index_cast %arg5 : i32 to index
      %c0_34 = arith.constant 0 : index
      %85 = vector.load %arg3[%c0_32, %c3_33, %84, %c0_34] : memref<1x4x32x8xf32, #tpu.memory_space<vmem>>, vector<1x1x1x8xf32>
      %86 = vector.shape_cast %85 : vector<1x1x1x8xf32> to vector<1x8xf32>
      %87 = arith.subf %83, %77 : vector<1x8xf32>
      %cst_35 = arith.constant 1.000000e+00 : f32
      %88 = vector.broadcast %cst_35 : f32 to vector<1x8xf32>
      %89 = arith.addf %87, %88 : vector<1x8xf32>
      %90 = arith.subf %86, %80 : vector<1x8xf32>
      %cst_36 = arith.constant 1.000000e+00 : f32
      %91 = vector.broadcast %cst_36 : f32 to vector<1x8xf32>
      %92 = arith.addf %90, %91 : vector<1x8xf32>
      %93 = arith.mulf %89, %92 : vector<1x8xf32>
      %94 = vector.broadcast %31 : vector<8x1xf32> to vector<8x8xf32>
      %95 = vector.broadcast %77 : vector<1x8xf32> to vector<8x8xf32>
      %96 = arith.maximumf %94, %95 : vector<8x8xf32>
      %97 = vector.broadcast %32 : vector<8x1xf32> to vector<8x8xf32>
      %98 = vector.broadcast %80 : vector<1x8xf32> to vector<8x8xf32>
      %99 = arith.maximumf %97, %98 : vector<8x8xf32>
      %100 = vector.broadcast %33 : vector<8x1xf32> to vector<8x8xf32>
      %101 = vector.broadcast %83 : vector<1x8xf32> to vector<8x8xf32>
      %102 = arith.minimumf %100, %101 : vector<8x8xf32>
      %103 = vector.broadcast %34 : vector<8x1xf32> to vector<8x8xf32>
      %104 = vector.broadcast %86 : vector<1x8xf32> to vector<8x8xf32>
      %105 = arith.minimumf %103, %104 : vector<8x8xf32>
      %106 = arith.subf %102, %96 : vector<8x8xf32>
      %cst_37 = arith.constant 1.000000e+00 : f32
      %107 = vector.broadcast %cst_37 : f32 to vector<8x8xf32>
      %108 = arith.addf %106, %107 : vector<8x8xf32>
      %cst_38 = arith.constant 0.000000e+00 : f32
      %109 = vector.broadcast %cst_38 : f32 to vector<8x8xf32>
      %110 = arith.maximumf %108, %109 : vector<8x8xf32>
      %111 = arith.subf %105, %99 : vector<8x8xf32>
      %cst_39 = arith.constant 1.000000e+00 : f32
      %112 = vector.broadcast %cst_39 : f32 to vector<8x8xf32>
      %113 = arith.addf %111, %112 : vector<8x8xf32>
      %cst_40 = arith.constant 0.000000e+00 : f32
      %114 = vector.broadcast %cst_40 : f32 to vector<8x8xf32>
      %115 = arith.maximumf %113, %114 : vector<8x8xf32>
      %116 = arith.mulf %110, %115 : vector<8x8xf32>
      %117 = vector.broadcast %41 : vector<8x1xf32> to vector<8x8xf32>
      %118 = vector.broadcast %93 : vector<1x8xf32> to vector<8x8xf32>
      %119 = arith.addf %117, %118 : vector<8x8xf32>
      %120 = arith.subf %119, %116 : vector<8x8xf32>
      %121 = tpu.reciprocal %120 {approx = true} : vector<8x8xf32> -> vector<8x8xf32>
      %122 = arith.mulf %120, %121 : vector<8x8xf32>
      %cst_41 = arith.constant 2.000000e+00 : f32
      %123 = vector.broadcast %cst_41 : f32 to vector<8x8xf32>
      %124 = arith.subf %123, %122 : vector<8x8xf32>
      %125 = arith.mulf %121, %124 : vector<8x8xf32>
      %126 = arith.mulf %116, %125 : vector<8x8xf32>
      %127 = vector.broadcast %27 : i32 to vector<8x256xi32>
      %128 = arith.cmpi eq, %18, %127 : vector<8x256xi32>
      %cst_42 = arith.constant 0.000000e+00 : f32
      %129 = vector.shape_cast %arg6 : vector<1x256xf32> to vector<1x256xf32>
      %130 = vector.broadcast %129 : vector<1x256xf32> to vector<8x256xf32>
      %131 = vector.broadcast %cst_42 : f32 to vector<8x256xf32>
      %132 = arith.select %128, %130, %131 : vector<8x256xi1>, vector<8x256xf32>
      %cst_43 = arith.constant dense<0.000000e+00> : vector<8xf32>
      %133 = vector.multi_reduction <add>, %132, %cst_43 [1] : vector<8x256xf32> to vector<8xf32>
      %134 = vector.shape_cast %133 : vector<8xf32> to vector<8x1xf32>
      %false = arith.constant false
      %135 = vector.broadcast %false : i1 to vector<1x256xi1>
      %136 = vector.extract_strided_slice %134 {offsets = [0, 0], sizes = [1, 1], strides = [1, 1]} : vector<8x1xf32> to vector<1x1xf32>
      %cst_44 = arith.constant 5.000000e-01 : f32
      %137 = vector.broadcast %cst_44 : f32 to vector<1x1xf32>
      %138 = arith.cmpf ogt, %136, %137 : vector<1x1xf32>
      %139 = vector.extract_strided_slice %74 {offsets = [0, 0], sizes = [1, 256], strides = [1, 1]} : vector<8x256xf32> to vector<1x256xf32>
      %cst_45 = arith.constant 0.699999988 : f32
      %140 = vector.broadcast %cst_45 : f32 to vector<1x256xf32>
      %141 = arith.cmpf ogt, %139, %140 : vector<1x256xf32>
      %c0_i32_46 = arith.constant 0 : i32
      %142 = arith.addi %27, %c0_i32_46 : i32
      %143 = vector.broadcast %142 : i32 to vector<1x256xi32>
      %144 = arith.cmpi sgt, %15, %143 : vector<1x256xi32>
      %145 = arith.andi %141, %144 : vector<1x256xi1>
      %146 = vector.broadcast %138 : vector<1x1xi1> to vector<1x256xi1>
      %147 = arith.andi %145, %146 : vector<1x256xi1>
      %148 = arith.ori %135, %147 : vector<1x256xi1>
      %149 = vector.extract_strided_slice %126 {offsets = [0, 0], sizes = [8, 1], strides = [1, 1]} : vector<8x8xf32> to vector<8x1xf32>
      %cst_47 = arith.constant 0.699999988 : f32
      %150 = vector.broadcast %cst_47 : f32 to vector<8x1xf32>
      %151 = arith.cmpf ogt, %149, %150 : vector<8x1xf32>
      %c0_i32_48 = arith.constant 0 : i32
      %152 = vector.broadcast %c0_i32_48 : i32 to vector<8x1xi32>
      %153 = arith.cmpi sgt, %19, %152 : vector<8x1xi32>
      %154 = arith.andi %151, %153 : vector<8x1xi1>
      %155 = vector.broadcast %138 : vector<1x1xi1> to vector<8x1xi1>
      %156 = arith.andi %154, %155 : vector<8x1xi1>
      %cst_49 = arith.constant 0.000000e+00 : f32
      %157 = vector.broadcast %cst_49 : f32 to vector<8x1xf32>
      %158 = arith.select %156, %157, %134 : vector<8x1xi1>, vector<8x1xf32>
      %159 = vector.extract_strided_slice %158 {offsets = [1, 0], sizes = [1, 1], strides = [1, 1]} : vector<8x1xf32> to vector<1x1xf32>
      %cst_50 = arith.constant 5.000000e-01 : f32
      %160 = vector.broadcast %cst_50 : f32 to vector<1x1xf32>
      %161 = arith.cmpf ogt, %159, %160 : vector<1x1xf32>
      %162 = vector.extract_strided_slice %74 {offsets = [1, 0], sizes = [1, 256], strides = [1, 1]} : vector<8x256xf32> to vector<1x256xf32>
      %cst_51 = arith.constant 0.699999988 : f32
      %163 = vector.broadcast %cst_51 : f32 to vector<1x256xf32>
      %164 = arith.cmpf ogt, %162, %163 : vector<1x256xf32>
      %c1_i32_52 = arith.constant 1 : i32
      %165 = arith.addi %27, %c1_i32_52 : i32
      %166 = vector.broadcast %165 : i32 to vector<1x256xi32>
      %167 = arith.cmpi sgt, %15, %166 : vector<1x256xi32>
      %168 = arith.andi %164, %167 : vector<1x256xi1>
      %169 = vector.broadcast %161 : vector<1x1xi1> to vector<1x256xi1>
      %170 = arith.andi %168, %169 : vector<1x256xi1>
      %171 = arith.ori %148, %170 : vector<1x256xi1>
      %172 = vector.extract_strided_slice %126 {offsets = [0, 1], sizes = [8, 1], strides = [1, 1]} : vector<8x8xf32> to vector<8x1xf32>
      %cst_53 = arith.constant 0.699999988 : f32
      %173 = vector.broadcast %cst_53 : f32 to vector<8x1xf32>
      %174 = arith.cmpf ogt, %172, %173 : vector<8x1xf32>
      %c1_i32_54 = arith.constant 1 : i32
      %175 = vector.broadcast %c1_i32_54 : i32 to vector<8x1xi32>
      %176 = arith.cmpi sgt, %19, %175 : vector<8x1xi32>
      %177 = arith.andi %174, %176 : vector<8x1xi1>
      %178 = vector.broadcast %161 : vector<1x1xi1> to vector<8x1xi1>
      %179 = arith.andi %177, %178 : vector<8x1xi1>
      %cst_55 = arith.constant 0.000000e+00 : f32
      %180 = vector.broadcast %cst_55 : f32 to vector<8x1xf32>
      %181 = arith.select %179, %180, %158 : vector<8x1xi1>, vector<8x1xf32>
      %182 = vector.extract_strided_slice %181 {offsets = [2, 0], sizes = [1, 1], strides = [1, 1]} : vector<8x1xf32> to vector<1x1xf32>
      %cst_56 = arith.constant 5.000000e-01 : f32
      %183 = vector.broadcast %cst_56 : f32 to vector<1x1xf32>
      %184 = arith.cmpf ogt, %182, %183 : vector<1x1xf32>
      %185 = vector.extract_strided_slice %74 {offsets = [2, 0], sizes = [1, 256], strides = [1, 1]} : vector<8x256xf32> to vector<1x256xf32>
      %cst_57 = arith.constant 0.699999988 : f32
      %186 = vector.broadcast %cst_57 : f32 to vector<1x256xf32>
      %187 = arith.cmpf ogt, %185, %186 : vector<1x256xf32>
      %c2_i32 = arith.constant 2 : i32
      %188 = arith.addi %27, %c2_i32 : i32
      %189 = vector.broadcast %188 : i32 to vector<1x256xi32>
      %190 = arith.cmpi sgt, %15, %189 : vector<1x256xi32>
      %191 = arith.andi %187, %190 : vector<1x256xi1>
      %192 = vector.broadcast %184 : vector<1x1xi1> to vector<1x256xi1>
      %193 = arith.andi %191, %192 : vector<1x256xi1>
      %194 = arith.ori %171, %193 : vector<1x256xi1>
      %195 = vector.extract_strided_slice %126 {offsets = [0, 2], sizes = [8, 1], strides = [1, 1]} : vector<8x8xf32> to vector<8x1xf32>
      %cst_58 = arith.constant 0.699999988 : f32
      %196 = vector.broadcast %cst_58 : f32 to vector<8x1xf32>
      %197 = arith.cmpf ogt, %195, %196 : vector<8x1xf32>
      %c2_i32_59 = arith.constant 2 : i32
      %198 = vector.broadcast %c2_i32_59 : i32 to vector<8x1xi32>
      %199 = arith.cmpi sgt, %19, %198 : vector<8x1xi32>
      %200 = arith.andi %197, %199 : vector<8x1xi1>
      %201 = vector.broadcast %184 : vector<1x1xi1> to vector<8x1xi1>
      %202 = arith.andi %200, %201 : vector<8x1xi1>
      %cst_60 = arith.constant 0.000000e+00 : f32
      %203 = vector.broadcast %cst_60 : f32 to vector<8x1xf32>
      %204 = arith.select %202, %203, %181 : vector<8x1xi1>, vector<8x1xf32>
      %205 = vector.extract_strided_slice %204 {offsets = [3, 0], sizes = [1, 1], strides = [1, 1]} : vector<8x1xf32> to vector<1x1xf32>
      %cst_61 = arith.constant 5.000000e-01 : f32
      %206 = vector.broadcast %cst_61 : f32 to vector<1x1xf32>
      %207 = arith.cmpf ogt, %205, %206 : vector<1x1xf32>
      %208 = vector.extract_strided_slice %74 {offsets = [3, 0], sizes = [1, 256], strides = [1, 1]} : vector<8x256xf32> to vector<1x256xf32>
      %cst_62 = arith.constant 0.699999988 : f32
      %209 = vector.broadcast %cst_62 : f32 to vector<1x256xf32>
      %210 = arith.cmpf ogt, %208, %209 : vector<1x256xf32>
      %c3_i32 = arith.constant 3 : i32
      %211 = arith.addi %27, %c3_i32 : i32
      %212 = vector.broadcast %211 : i32 to vector<1x256xi32>
      %213 = arith.cmpi sgt, %15, %212 : vector<1x256xi32>
      %214 = arith.andi %210, %213 : vector<1x256xi1>
      %215 = vector.broadcast %207 : vector<1x1xi1> to vector<1x256xi1>
      %216 = arith.andi %214, %215 : vector<1x256xi1>
      %217 = arith.ori %194, %216 : vector<1x256xi1>
      %218 = vector.extract_strided_slice %126 {offsets = [0, 3], sizes = [8, 1], strides = [1, 1]} : vector<8x8xf32> to vector<8x1xf32>
      %cst_63 = arith.constant 0.699999988 : f32
      %219 = vector.broadcast %cst_63 : f32 to vector<8x1xf32>
      %220 = arith.cmpf ogt, %218, %219 : vector<8x1xf32>
      %c3_i32_64 = arith.constant 3 : i32
      %221 = vector.broadcast %c3_i32_64 : i32 to vector<8x1xi32>
      %222 = arith.cmpi sgt, %19, %221 : vector<8x1xi32>
      %223 = arith.andi %220, %222 : vector<8x1xi1>
      %224 = vector.broadcast %207 : vector<1x1xi1> to vector<8x1xi1>
      %225 = arith.andi %223, %224 : vector<8x1xi1>
      %cst_65 = arith.constant 0.000000e+00 : f32
      %226 = vector.broadcast %cst_65 : f32 to vector<8x1xf32>
      %227 = arith.select %225, %226, %204 : vector<8x1xi1>, vector<8x1xf32>
      %228 = vector.extract_strided_slice %227 {offsets = [4, 0], sizes = [1, 1], strides = [1, 1]} : vector<8x1xf32> to vector<1x1xf32>
      %cst_66 = arith.constant 5.000000e-01 : f32
      %229 = vector.broadcast %cst_66 : f32 to vector<1x1xf32>
      %230 = arith.cmpf ogt, %228, %229 : vector<1x1xf32>
      %231 = vector.extract_strided_slice %74 {offsets = [4, 0], sizes = [1, 256], strides = [1, 1]} : vector<8x256xf32> to vector<1x256xf32>
      %cst_67 = arith.constant 0.699999988 : f32
      %232 = vector.broadcast %cst_67 : f32 to vector<1x256xf32>
      %233 = arith.cmpf ogt, %231, %232 : vector<1x256xf32>
      %c4_i32 = arith.constant 4 : i32
      %234 = arith.addi %27, %c4_i32 : i32
      %235 = vector.broadcast %234 : i32 to vector<1x256xi32>
      %236 = arith.cmpi sgt, %15, %235 : vector<1x256xi32>
      %237 = arith.andi %233, %236 : vector<1x256xi1>
      %238 = vector.broadcast %230 : vector<1x1xi1> to vector<1x256xi1>
      %239 = arith.andi %237, %238 : vector<1x256xi1>
      %240 = arith.ori %217, %239 : vector<1x256xi1>
      %241 = vector.extract_strided_slice %126 {offsets = [0, 4], sizes = [8, 1], strides = [1, 1]} : vector<8x8xf32> to vector<8x1xf32>
      %cst_68 = arith.constant 0.699999988 : f32
      %242 = vector.broadcast %cst_68 : f32 to vector<8x1xf32>
      %243 = arith.cmpf ogt, %241, %242 : vector<8x1xf32>
      %c4_i32_69 = arith.constant 4 : i32
      %244 = vector.broadcast %c4_i32_69 : i32 to vector<8x1xi32>
      %245 = arith.cmpi sgt, %19, %244 : vector<8x1xi32>
      %246 = arith.andi %243, %245 : vector<8x1xi1>
      %247 = vector.broadcast %230 : vector<1x1xi1> to vector<8x1xi1>
      %248 = arith.andi %246, %247 : vector<8x1xi1>
      %cst_70 = arith.constant 0.000000e+00 : f32
      %249 = vector.broadcast %cst_70 : f32 to vector<8x1xf32>
      %250 = arith.select %248, %249, %227 : vector<8x1xi1>, vector<8x1xf32>
      %251 = vector.extract_strided_slice %250 {offsets = [5, 0], sizes = [1, 1], strides = [1, 1]} : vector<8x1xf32> to vector<1x1xf32>
      %cst_71 = arith.constant 5.000000e-01 : f32
      %252 = vector.broadcast %cst_71 : f32 to vector<1x1xf32>
      %253 = arith.cmpf ogt, %251, %252 : vector<1x1xf32>
      %254 = vector.extract_strided_slice %74 {offsets = [5, 0], sizes = [1, 256], strides = [1, 1]} : vector<8x256xf32> to vector<1x256xf32>
      %cst_72 = arith.constant 0.699999988 : f32
      %255 = vector.broadcast %cst_72 : f32 to vector<1x256xf32>
      %256 = arith.cmpf ogt, %254, %255 : vector<1x256xf32>
      %c5_i32 = arith.constant 5 : i32
      %257 = arith.addi %27, %c5_i32 : i32
      %258 = vector.broadcast %257 : i32 to vector<1x256xi32>
      %259 = arith.cmpi sgt, %15, %258 : vector<1x256xi32>
      %260 = arith.andi %256, %259 : vector<1x256xi1>
      %261 = vector.broadcast %253 : vector<1x1xi1> to vector<1x256xi1>
      %262 = arith.andi %260, %261 : vector<1x256xi1>
      %263 = arith.ori %240, %262 : vector<1x256xi1>
      %264 = vector.extract_strided_slice %126 {offsets = [0, 5], sizes = [8, 1], strides = [1, 1]} : vector<8x8xf32> to vector<8x1xf32>
      %cst_73 = arith.constant 0.699999988 : f32
      %265 = vector.broadcast %cst_73 : f32 to vector<8x1xf32>
      %266 = arith.cmpf ogt, %264, %265 : vector<8x1xf32>
      %c5_i32_74 = arith.constant 5 : i32
      %267 = vector.broadcast %c5_i32_74 : i32 to vector<8x1xi32>
      %268 = arith.cmpi sgt, %19, %267 : vector<8x1xi32>
      %269 = arith.andi %266, %268 : vector<8x1xi1>
      %270 = vector.broadcast %253 : vector<1x1xi1> to vector<8x1xi1>
      %271 = arith.andi %269, %270 : vector<8x1xi1>
      %cst_75 = arith.constant 0.000000e+00 : f32
      %272 = vector.broadcast %cst_75 : f32 to vector<8x1xf32>
      %273 = arith.select %271, %272, %250 : vector<8x1xi1>, vector<8x1xf32>
      %274 = vector.extract_strided_slice %273 {offsets = [6, 0], sizes = [1, 1], strides = [1, 1]} : vector<8x1xf32> to vector<1x1xf32>
      %cst_76 = arith.constant 5.000000e-01 : f32
      %275 = vector.broadcast %cst_76 : f32 to vector<1x1xf32>
      %276 = arith.cmpf ogt, %274, %275 : vector<1x1xf32>
      %277 = vector.extract_strided_slice %74 {offsets = [6, 0], sizes = [1, 256], strides = [1, 1]} : vector<8x256xf32> to vector<1x256xf32>
      %cst_77 = arith.constant 0.699999988 : f32
      %278 = vector.broadcast %cst_77 : f32 to vector<1x256xf32>
      %279 = arith.cmpf ogt, %277, %278 : vector<1x256xf32>
      %c6_i32 = arith.constant 6 : i32
      %280 = arith.addi %27, %c6_i32 : i32
      %281 = vector.broadcast %280 : i32 to vector<1x256xi32>
      %282 = arith.cmpi sgt, %15, %281 : vector<1x256xi32>
      %283 = arith.andi %279, %282 : vector<1x256xi1>
      %284 = vector.broadcast %276 : vector<1x1xi1> to vector<1x256xi1>
      %285 = arith.andi %283, %284 : vector<1x256xi1>
      %286 = arith.ori %263, %285 : vector<1x256xi1>
      %287 = vector.extract_strided_slice %126 {offsets = [0, 6], sizes = [8, 1], strides = [1, 1]} : vector<8x8xf32> to vector<8x1xf32>
      %cst_78 = arith.constant 0.699999988 : f32
      %288 = vector.broadcast %cst_78 : f32 to vector<8x1xf32>
      %289 = arith.cmpf ogt, %287, %288 : vector<8x1xf32>
      %c6_i32_79 = arith.constant 6 : i32
      %290 = vector.broadcast %c6_i32_79 : i32 to vector<8x1xi32>
      %291 = arith.cmpi sgt, %19, %290 : vector<8x1xi32>
      %292 = arith.andi %289, %291 : vector<8x1xi1>
      %293 = vector.broadcast %276 : vector<1x1xi1> to vector<8x1xi1>
      %294 = arith.andi %292, %293 : vector<8x1xi1>
      %cst_80 = arith.constant 0.000000e+00 : f32
      %295 = vector.broadcast %cst_80 : f32 to vector<8x1xf32>
      %296 = arith.select %294, %295, %273 : vector<8x1xi1>, vector<8x1xf32>
      %297 = vector.extract_strided_slice %296 {offsets = [7, 0], sizes = [1, 1], strides = [1, 1]} : vector<8x1xf32> to vector<1x1xf32>
      %cst_81 = arith.constant 5.000000e-01 : f32
      %298 = vector.broadcast %cst_81 : f32 to vector<1x1xf32>
      %299 = arith.cmpf ogt, %297, %298 : vector<1x1xf32>
      %300 = vector.extract_strided_slice %74 {offsets = [7, 0], sizes = [1, 256], strides = [1, 1]} : vector<8x256xf32> to vector<1x256xf32>
      %cst_82 = arith.constant 0.699999988 : f32
      %301 = vector.broadcast %cst_82 : f32 to vector<1x256xf32>
      %302 = arith.cmpf ogt, %300, %301 : vector<1x256xf32>
      %c7_i32 = arith.constant 7 : i32
      %303 = arith.addi %27, %c7_i32 : i32
      %304 = vector.broadcast %303 : i32 to vector<1x256xi32>
      %305 = arith.cmpi sgt, %15, %304 : vector<1x256xi32>
      %306 = arith.andi %302, %305 : vector<1x256xi1>
      %307 = vector.broadcast %299 : vector<1x1xi1> to vector<1x256xi1>
      %308 = arith.andi %306, %307 : vector<1x256xi1>
      %309 = arith.ori %286, %308 : vector<1x256xi1>
      %cst_83 = arith.constant 0.000000e+00 : f32
      %310 = vector.broadcast %cst_83 : f32 to vector<1x256xf32>
      %311 = arith.select %309, %310, %arg6 : vector<1x256xi1>, vector<1x256xf32>
      scf.yield %311 : vector<1x256xf32>
    }
    %c32_i32_10 = arith.constant 32 : i32
    %c0_11 = arith.constant 0 : index
    %c0_12 = arith.constant 0 : index
    %c0_13 = arith.constant 0 : index
    %23 = vector.load %arg4[%c0_11, %c0_12, %c0_13] : memref<1x1x256xf32, #tpu.memory_space<vmem>>, vector<1x1x256xf32>
    %24 = vector.shape_cast %23 : vector<1x1x256xf32> to vector<1x256xf32>
    %25 = vector.shape_cast %22 : vector<1x256xf32> to vector<1x1x256xf32>
    tpu.vector_store %arg4[%c0_11, %c0_12, %c0_13], %25 {strides = array<i32>} : memref<1x1x256xf32, #tpu.memory_space<vmem>>, vector<1x1x256xf32>,
    return
  }
  func.func @transform_0(%arg0: i32) -> (i32, i32, i32) {
    %c0_i32 = arith.constant 0 : i32
    %c0_i32_0 = arith.constant 0 : i32
    %c0_i32_1 = arith.constant 0 : i32
    return %arg0, %c0_i32, %c0_i32_0 : i32, i32, i32
  }
  func.func @transform_1(%arg0: i32) -> (i32, i32, i32) {
    %c0_i32 = arith.constant 0 : i32
    %c0_i32_0 = arith.constant 0 : i32
    %c0_i32_1 = arith.constant 0 : i32
    return %arg0, %c0_i32, %c0_i32_0 : i32, i32, i32
  }
  func.func @transform_2(%arg0: i32) -> (i32, i32, i32, i32) {
    %c0_i32 = arith.constant 0 : i32
    %c0_i32_0 = arith.constant 0 : i32
    %c0_i32_1 = arith.constant 0 : i32
    %c0_i32_2 = arith.constant 0 : i32
    return %arg0, %c0_i32, %c0_i32_0, %c0_i32_1 : i32, i32, i32, i32
  }
  func.func @transform_3(%arg0: i32) -> (i32, i32, i32) {
    %c0_i32 = arith.constant 0 : i32
    %c0_i32_0 = arith.constant 0 : i32
    %c0_i32_1 = arith.constant 0 : i32
    return %arg0, %c0_i32, %c0_i32_0 : i32, i32, i32
  }
}

</mosaic_0001>

<llo_original>
// kernel: proposal_layer_forward.2
$region0: #{proposal_layer_forward.2}
  #allocation0 [shape = 'u32[]', space=smem, size = 0x4, offset = 0x4, fixed_abs, tag = 'smem constant byte address 0x4 - core index']
  #allocation1 [shape = 'u32[144,128]{1,0:T(1,128)}', space=vmem, size = 0x12000, scoped, tag = 'internal scratch']
  %s0 = inlined_call_operand.vmem [shape: f32[4,8,128], index: 0, kind: input, shape index: {}]
  %s1 = inlined_call_operand.vmem [shape: f32[2,4,8,128], index: 1, kind: input, shape index: {}]
  %s2 = inlined_call_operand.vmem [shape: f32[2,3], index: 2, kind: input, shape index: {}]
  %s3 = inlined_call_operand.vmem [shape: f32[2,4,8,128], index: 3, kind: output, shape index: {}]
  %s4 = sld [smem:[#allocation0]]
  $region49: #{proposal_layer_forward.2} parent=0
    _
  %s6 = ssub.s32 1, %s4
  %s7 = scalar_select 0, %s6, %s4
  $region1: #{proposal_layer_forward.2} parent=0
    #allocation2 [shape = 'u8[1024]{0}', space=smem, size = 0x400, scoped, tag = 'input window, operand 2, single buffered']
    #allocation3 [shape = 's32[2]{0}', space=sflag, size = 0x8, scoped, tag = 'scoped memory for proposal_layer_forward.2']
    %8 = vsyncpa [#allocation3], 0
    loop: start=0, step=1, limit=4
    $region2: #{proposal_layer_forward.2} parent=1 // loop_pre_header
      _
    $region3: #{proposal_layer_forward.2} parent=1 // loop_header
      %s10 = sphi 0, %s14
      %p11 = scmp.ge.s32.totalorder %s10, 4
      %s17 = sphi 0, %s29
      %s18 = sphi 0, %s25
      %s19 = sphi 0, %s17
      %s20 = sphi 0, %s18
      %s21 = sphi 0, %s19
      %s22 = sphi 0, %s20
      %s32 = sphi 0, %s34
      %s35 = sphi 0, %s32
      %s36 = sphi 0, %s35
      %s52 = sphi 0, %s36
      %s60 = sphi 0, %s62
      %s63 = sphi 0, %s60
      %s64 = sphi 0, %s63
      %s80 = sphi 0, %s64
      %s84 = sphi 0, %s84
      %s86 = sphi 0, %s84
      %s87 = sphi 0, %s86
      %s101 = sphi 0, %s87
      %s109 = sphi 0, %s111
      %s112 = sphi 0, %s109
      %s113 = sphi 0, %s112
      %s129 = sphi 0, %s113
    $region4: #{proposal_layer_forward.2} parent=1 // loop_header_branch
      %13 = sbr.rel (%p11) target = $region8
    $region5: #{proposal_layer_forward.2} parent=1 // loop_body
      %s15 = ssub.s32 %s10, 1
      %s16 = ssub.s32 %s10, 2
      %s23 = sadd.s32 1, %s18
      %p24 = scmp.ge.s32.totalorder %s23, 1
      %s25 = scalar_select %p24, 0, %s23
      %s26 = sadd.s32 1, %s17
      %s27 = scalar_select %p24, %s26, %s17
      %p28 = scmp.ge.s32.totalorder %s27, 2
      %s29 = scalar_select %p28, 0, %s27
      %s30 = ssub.s32 %s18, %s25
      %p31 = scmp.eq.s32.totalorder %s30, 0
      %s33 = sadd.s32 %s32, 1
      %s34 = scalar_select %p31, %s32, %s33
      %p37 = pneg %p31
      %p38 = scmp.eq.s32.totalorder %s10, 1
      %p39 = por %p37, %p38
      %p40 = scmp.ne.s32.totalorder %s32, %s35
      %p41 = scmp.eq.s32.totalorder %s10, 0
      %p42 = por %p40, %p41
      %p43 = scmp.ne.s32.totalorder %s32, %s35
      %p44 = scmp.eq.s32.totalorder %s15, 1
      %p45 = por %p43, %p44
      %p46 = scmp.ne.s32.totalorder %s35, %s36
      %p47 = scmp.eq.s32.totalorder %s15, 0
      %p48 = por %p46, %p47
      %p49 = scmp.ne.s32.totalorder %s35, %s36
      %p50 = scmp.eq.s32.totalorder %s16, 1
      %p51 = por %p49, %p50
      %p53 = scmp.ne.s32.totalorder %s36, %s52
      %p54 = scmp.eq.s32.totalorder %s16, 0
      %p55 = por %p53, %p54
      %s56 = ssub.s32 %s17, %s29
      %s57 = ssub.s32 %s18, %s25
      %s58 = sor.u32 %s56, %s57
      %p59 = scmp.eq.s32.totalorder %s58, 0
      %s61 = sadd.s32 %s60, 1
      %s62 = scalar_select %p59, %s60, %s61
      %p65 = pneg %p59
      %p66 = scmp.eq.s32.totalorder %s10, 1
      %p67 = por %p65, %p66
      %p68 = scmp.ne.s32.totalorder %s60, %s63
      %p69 = scmp.eq.s32.totalorder %s10, 0
      %p70 = por %p68, %p69
      %p71 = scmp.ne.s32.totalorder %s60, %s63
      %p72 = scmp.eq.s32.totalorder %s15, 1
      %p73 = por %p71, %p72
      %p74 = scmp.ne.s32.totalorder %s63, %s64
      %p75 = scmp.eq.s32.totalorder %s15, 0
      %p76 = por %p74, %p75
      %p77 = scmp.ne.s32.totalorder %s63, %s64
      %p78 = scmp.eq.s32.totalorder %s16, 1
      %p79 = por %p77, %p78
      %p81 = scmp.ne.s32.totalorder %s64, %s80
      %p82 = scmp.eq.s32.totalorder %s16, 0
      %p83 = por %p81, %p82
      %s85 = sadd.s32 %s84, 1
      %p88 = scmp.eq.s32.totalorder %s10, 1
      %p89 = scmp.ne.s32.totalorder %s84, %s86
      %p90 = scmp.eq.s32.totalorder %s10, 0
      %p91 = por %p89, %p90
      %p92 = scmp.ne.s32.totalorder %s84, %s86
      %p93 = scmp.eq.s32.totalorder %s15, 1
      %p94 = por %p92, %p93
      %p95 = scmp.ne.s32.totalorder %s86, %s87
      %p96 = scmp.eq.s32.totalorder %s15, 0
      %p97 = por %p95, %p96
      %p98 = scmp.ne.s32.totalorder %s86, %s87
      %p99 = scmp.eq.s32.totalorder %s16, 1
      %p100 = por %p98, %p99
      %p102 = scmp.ne.s32.totalorder %s87, %s101
      %p103 = scmp.eq.s32.totalorder %s16, 0
      %p104 = por %p102, %p103
      %s105 = ssub.s32 %s17, %s29
      %s106 = ssub.s32 %s18, %s25
      %s107 = sor.u32 %s105, %s106
      %p108 = scmp.eq.s32.totalorder %s107, 0
      %s110 = sadd.s32 %s109, 1
      %s111 = scalar_select %p108, %s109, %s110
      %p114 = pneg %p108
      %p115 = scmp.eq.s32.totalorder %s10, 1
      %p116 = por %p114, %p115
      %p117 = scmp.ne.s32.totalorder %s109, %s112
      %p118 = scmp.eq.s32.totalorder %s10, 0
      %p119 = por %p117, %p118
      %p120 = scmp.ne.s32.totalorder %s109, %s112
      %p121 = scmp.eq.s32.totalorder %s15, 1
      %p122 = por %p120, %p121
      %p123 = scmp.ne.s32.totalorder %s112, %s113
      %p124 = scmp.eq.s32.totalorder %s15, 0
      %p125 = por %p123, %p124
      %p126 = scmp.ne.s32.totalorder %s112, %s113
      %p127 = scmp.eq.s32.totalorder %s16, 1
      %p128 = por %p126, %p127
      %p130 = scmp.ne.s32.totalorder %s113, %s129
      %p131 = scmp.eq.s32.totalorder %s16, 0
      %p132 = por %p130, %p131
      %p133 = scmp.le.s32.totalorder 1, %s10
      %p134 = scmp.lt.s32.totalorder %s10, 3
      %p135 = pnand %p133, %p134
      %p136 = pneg %p135
      // Predicated region
      $region9: #{proposal_layer_forward.2} parent=5 // pred_check
        _
      $region10: #{proposal_layer_forward.2} parent=5 // pred_check_branch
        %138 = sbr.rel (%p135) target = $region12
      $region11: #{proposal_layer_forward.2} parent=5 // pred_region
        %s139 = ssub.s32 %s10, 1
        // Predicated region
        $region13: #{proposal_layer_forward.2} parent=11 // pred_check
          %p140 = pneg %p48
        $region14: #{proposal_layer_forward.2} parent=11 // pred_check_branch
          %142 = sbr.rel (%p140) target = $region16
        $region15: #{proposal_layer_forward.2} parent=11 // pred_region
          %p143 = scmp.lt.s32.totalorder %s20, 0
          %s144 = scalar_select %p143, %s20, 0
          %s145 = smul.addr %s144, 8
          %s146 = scalar_lea.vmem %s0, %s145
        $region16: #{proposal_layer_forward.2} parent=11 // pred_fallthru
          _
        // Predicated region
        $region17: #{proposal_layer_forward.2} parent=11 // pred_check
          %p147 = pneg %p97
        $region18: #{proposal_layer_forward.2} parent=11 // pred_check_branch
          %149 = sbr.rel (%p147) target = $region20
        $region19: #{proposal_layer_forward.2} parent=11 // pred_region
          %s151 = ssub.s32 32, 32
          %152 = vsyncadd [#allocation3], %s151
          %s154 = sshll.u32 %s2, 4
          %s155 = int_to_ptr.vmem [resolvable:$true] %s154
          %157 = dma.vmem_to_smem %s155, 32, [#allocation2], [#allocation3]
        $region20: #{proposal_layer_forward.2} parent=11 // pred_fallthru
          _
      $region12: #{proposal_layer_forward.2} parent=5 // pred_fallthru
        _
      %p158 = scmp.lt.s32.totalorder %s10, 2
      // Predicated region
      $region21: #{proposal_layer_forward.2} parent=5 // pred_check
        %p159 = pneg %p158
      $region22: #{proposal_layer_forward.2} parent=5 // pred_check_branch
        %161 = sbr.rel (%p159) target = $region24
      $region23: #{proposal_layer_forward.2} parent=5 // pred_region
        // Predicated region
        $region25: #{proposal_layer_forward.2} parent=23 // pred_check
          %p162 = pneg %p70
        $region26: #{proposal_layer_forward.2} parent=23 // pred_check_branch
          %164 = sbr.rel (%p162) target = $region28
        $region27: #{proposal_layer_forward.2} parent=23 // pred_region
          %p165 = scmp.lt.s32.totalorder %s17, 1
          %s166 = scalar_select %p165, %s17, 1
          %p167 = scmp.lt.s32.totalorder %s18, 0
          %s168 = scalar_select %p167, %s18, 0
          %s169 = smul.addr %s166, 4
          %s170 = sadd.s32 %s168, %s169
          %s171 = smul.addr %s170, 8
          %s172 = scalar_lea.vmem %s1, %s171
        $region28: #{proposal_layer_forward.2} parent=23 // pred_fallthru
          _
      $region24: #{proposal_layer_forward.2} parent=5 // pred_fallthru
        _
      %p173 = scmp.le.s32.totalorder 1, %s10
      %p174 = scmp.lt.s32.totalorder %s10, 3
      %p175 = pnand %p173, %p174
      %p176 = pneg %p175
      // Predicated region
      $region29: #{proposal_layer_forward.2} parent=5 // pred_check
        _
      $region30: #{proposal_layer_forward.2} parent=5 // pred_check_branch
        %178 = sbr.rel (%p175) target = $region32
      $region31: #{proposal_layer_forward.2} parent=5 // pred_region
        %s179 = ssub.s32 %s10, 1
        // Predicated region
        $region33: #{proposal_layer_forward.2} parent=31 // pred_check
          %p180 = pneg %p97
        $region34: #{proposal_layer_forward.2} parent=31 // pred_check_branch
          %182 = sbr.rel (%p180) target = $region36
        $region35: #{proposal_layer_forward.2} parent=31 // pred_region
          %183 = dma.done [#allocation3], 32
        $region36: #{proposal_layer_forward.2} parent=31 // pred_fallthru
          _
        %184 = sfence
        %p185 = scmp.lt.s32.totalorder %s20, 0
        %s186 = scalar_select %p185, %s20, 0
        %s187 = smul.addr %s186, 8
        %s188 = scalar_lea.vmem %s0, %s187
        %p189 = pneg %p48
        %p190 = pneg %p45
        %p191 = scmp.lt.s32.totalorder %s19, 1
        %s192 = scalar_select %p191, %s19, 1
        %p193 = scmp.lt.s32.totalorder %s20, 0
        %s194 = scalar_select %p193, %s20, 0
        %s195 = smul.addr %s192, 4
        %s196 = sadd.s32 %s194, %s195
        %s197 = smul.addr %s196, 8
        %s198 = scalar_lea.vmem %s1, %s197
        %p199 = pneg %p76
        %p200 = pneg %p73
        %p201 = pneg %p97
        %p202 = pneg %p94
        %p203 = pneg %p125
        %p204 = pneg %p122
        %p205 = scmp.lt.s32.totalorder %s19, 1
        %s206 = scalar_select %p205, %s19, 1
        %p207 = scmp.lt.s32.totalorder %s20, 0
        %s208 = scalar_select %p207, %s20, 0
        %s209 = smul.addr %s206, 4
        %s210 = sadd.s32 %s208, %s209
        %s211 = smul.addr %s210, 8
        %s212 = scalar_lea.vmem %s3, %s211
        %p213 = scmp.lt.s32.totalorder %s20, 0
        %s214 = scalar_select %p213, %s20, 0
        %s215 = smul.addr %s214, 8
        %s216 = scalar_lea.vmem %s0, %s215
        %p217 = scmp.lt.s32.totalorder %s19, 1
        %s218 = scalar_select %p217, %s19, 1
        %p219 = scmp.lt.s32.totalorder %s20, 0
        %s220 = scalar_select %p219, %s20, 0
        %s221 = smul.addr %s218, 4
        %s222 = sadd.s32 %s220, %s221
        %s223 = smul.addr %s222, 8
        %s224 = scalar_lea.vmem %s1, %s223
        %p225 = scmp.lt.s32.totalorder %s19, 1
        %s226 = scalar_select %p225, %s19, 1
        %p227 = scmp.lt.s32.totalorder %s20, 0
        %s228 = scalar_select %p227, %s20, 0
        %s229 = smul.addr %s226, 4
        %s230 = sadd.s32 %s228, %s229
        %s231 = smul.addr %s230, 8
        %s232 = scalar_lea.vmem %s3, %s231
        %v233 = vld [vmem:[%s216] sm:$0xff]
        %s234 = scalar_lea.vmem %s216, 8
        %v235 = vld [vmem:[%s234] sm:$0xff]
        %s236 = scalar_lea.vmem %s216, 16
        %v237 = vld [vmem:[%s236] sm:$0xff]
        %s238 = scalar_lea.vmem %s216, 24
        %v239 = vld [vmem:[%s238] sm:$0xff]
        %v240 = vld [vmem:[%s224] sm:$0xff]
        %s241 = scalar_lea.vmem %s224, 8
        %v242 = vld [vmem:[%s241] sm:$0xff]
        %s243 = scalar_lea.vmem %s224, 16
        %v244 = vld [vmem:[%s243] sm:$0xff]
        %s245 = scalar_lea.vmem %s224, 24
        %v246 = vld [vmem:[%s245] sm:$0xff]
        %v247 = vsub.f32 %v237, %v233
        %v248 = vadd.f32 %v247, 1.0
        %v249 = vsub.f32 %v239, %v235
        %v250 = vadd.f32 %v249, 1.0
        %v251 = vmul.f32 %v248, 0.5
        %v252 = vadd.f32 %v233, %v251
        %v253 = vmul.f32 %v250, 0.5
        %v254 = vadd.f32 %v235, %v253
        %v255 = vmul.f32 %v240, %v248
        %v256 = vadd.f32 %v255, %v252
        %v257 = vmul.f32 %v242, %v250
        %v258 = vadd.f32 %v257, %v254
        %v259 = vmul.f32 %v244, 1.442695
        %v260 = vpow.pop %v259
        %v261 = vmul.f32 %v260, %v248
        %v262 = vmul.f32 %v246, 1.442695
        %v263 = vpow.pop %v262
        %v264 = vmul.f32 %v263, %v250
        %v265 = vmul.f32 %v261, 0.5
        %v266 = vsub.f32 %v256, %v265
        %v267 = vmul.f32 %v264, 0.5
        %v268 = vsub.f32 %v258, %v267
        %v269 = vadd.f32 %v256, %v265
        %v270 = vadd.f32 %v258, %v267
        %s271 = smul.u32 %s19, 128
        %s272 = sld [smem:[#allocation2 + %s271]]
        %s273 = sadd.s32 %s271, 1
        %s274 = sld [smem:[#allocation2 + %s273]]
        %s275 = ssub.f32 %s274, 1.0
        %v276 = vmax.f32 %v266, 0.0
        %v277 = vstv %s275
        %v278 = vmin.f32 %v277, %v276
        %279 = vst [vmem:[%s232] sm:$0xff] %v278
        %s280 = ssub.f32 %s272, 1.0
        %v281 = vmax.f32 %v268, 0.0
        %v282 = vstv %s280
        %v283 = vmin.f32 %v282, %v281
        %s284 = scalar_lea.vmem %s232, 8
        %285 = vst [vmem:[%s284] sm:$0xff] %v283
        %v286 = vmax.f32 %v269, 0.0
        %v287 = vmin.f32 %v277, %v286
        %s288 = scalar_lea.vmem %s232, 16
        %289 = vst [vmem:[%s288] sm:$0xff] %v287
        %v290 = vmax.f32 %v270, 0.0
        %v291 = vmin.f32 %v282, %v290
        %s292 = scalar_lea.vmem %s232, 24
        %293 = vst [vmem:[%s292] sm:$0xff] %v291
        %p294 = scmp.lt.s32.totalorder %s19, 1
        %s295 = scalar_select %p294, %s19, 1
        %p296 = scmp.lt.s32.totalorder %s20, 0
        %s297 = scalar_select %p296, %s20, 0
        %s298 = smul.addr %s295, 4
        %s299 = sadd.s32 %s297, %s298
        %s300 = smul.addr %s299, 8
        %s301 = scalar_lea.vmem %s3, %s300
        // Predicated region
        $region37: #{proposal_layer_forward.2} parent=31 // pred_check
          %p302 = pneg %p122
        $region38: #{proposal_layer_forward.2} parent=31 // pred_check_branch
          %304 = sbr.rel (%p302) target = $region40
        $region39: #{proposal_layer_forward.2} parent=31 // pred_region
          _
        $region40: #{proposal_layer_forward.2} parent=31 // pred_fallthru
          _
      $region32: #{proposal_layer_forward.2} parent=5 // pred_fallthru
        _
      %p305 = scmp.le.s32.totalorder 2, %s10
      // Predicated region
      $region41: #{proposal_layer_forward.2} parent=5 // pred_check
        %p306 = pneg %p305
      $region42: #{proposal_layer_forward.2} parent=5 // pred_check_branch
        %308 = sbr.rel (%p306) target = $region44
      $region43: #{proposal_layer_forward.2} parent=5 // pred_region
        %s309 = ssub.s32 %s10, 2
        // Predicated region
        $region45: #{proposal_layer_forward.2} parent=43 // pred_check
          %p310 = pneg %p128
        $region46: #{proposal_layer_forward.2} parent=43 // pred_check_branch
          %312 = sbr.rel (%p310) target = $region48
        $region47: #{proposal_layer_forward.2} parent=43 // pred_region
          %p313 = scmp.lt.s32.totalorder %s21, 1
          %s314 = scalar_select %p313, %s21, 1
          %p315 = scmp.lt.s32.totalorder %s22, 0
          %s316 = scalar_select %p315, %s22, 0
          %s317 = smul.addr %s314, 4
          %s318 = sadd.s32 %s316, %s317
          %s319 = smul.addr %s318, 8
          %s320 = scalar_lea.vmem %s3, %s319
        $region48: #{proposal_layer_forward.2} parent=43 // pred_fallthru
          _
      $region44: #{proposal_layer_forward.2} parent=5 // pred_fallthru
        _
    $region6: #{proposal_layer_forward.2} parent=1 // loop_footer
      %s14 = sadd.s32 1, %s10
    $region7: #{proposal_layer_forward.2} parent=1 // loop_footer_branch
      %9 = sbr.rel target = $region3
    $region8: #{proposal_layer_forward.2} parent=1 // loop_exit
      _
    %321 = vsyncpa [#allocation3], 1
    %s322 = scalar_lea.sflag [#allocation3], 1
    %323 = vsyncpa %s322, 1

// kernel: proposal_layer_forward.3
$region0: #{proposal_layer_forward.3}
  #allocation0 [shape = 'u32[]', space=smem, size = 0x4, offset = 0x4, fixed_abs, tag = 'smem constant byte address 0x4 - core index']
  #allocation1 [shape = 'u32[144,128]{1,0:T(1,128)}', space=vmem, size = 0x12000, scoped, tag = 'internal scratch']
  %s0 = inlined_call_operand.vmem [shape: f32[2,4,256], index: 0, kind: input, shape index: {}]
  %s1 = inlined_call_operand.vmem [shape: f32[2,256,4], index: 1, kind: input, shape index: {}]
  %s2 = inlined_call_operand.vmem [shape: f32[2,4,32,8], index: 2, kind: input, shape index: {}]
  %s3 = inlined_call_operand.vmem [shape: f32[2,1,256], index: 3, kind: output, shape index: {}]
  %s4 = sld [smem:[#allocation0]]
  $region52: #{proposal_layer_forward.3} parent=0
    _
  %s6 = ssub.s32 1, %s4
  %s7 = scalar_select 0, %s6, %s4
  loop: start=0, step=1, limit=4
  $region2: #{proposal_layer_forward.3} parent=0 // loop_pre_header
    _
  $region3: #{proposal_layer_forward.3} parent=0 // loop_header
    %s9 = sphi 0, %s13
    %p10 = scmp.ge.s32.totalorder %s9, 4
    %s19 = sphi 0, %s21
    %s22 = sphi 0, %s19
    %s23 = sphi 0, %s22
    %s39 = sphi 0, %s23
    %s45 = sphi 0, %s47
    %s48 = sphi 0, %s45
    %s49 = sphi 0, %s48
    %s65 = sphi 0, %s49
    %s71 = sphi 0, %s73
    %s74 = sphi 0, %s71
    %s75 = sphi 0, %s74
    %s91 = sphi 0, %s75
    %s97 = sphi 0, %s99
    %s100 = sphi 0, %s97
    %s101 = sphi 0, %s100
    %s117 = sphi 0, %s101
  $region4: #{proposal_layer_forward.3} parent=0 // loop_header_branch
    %12 = sbr.rel (%p10) target = $region8
  $region5: #{proposal_layer_forward.3} parent=0 // loop_body
    %s14 = ssub.s32 %s9, 1
    %s15 = ssub.s32 %s9, 2
    %s16 = sadd.s32 %s9, 1
    %s17 = ssub.s32 %s9, %s16
    %p18 = scmp.eq.s32.totalorder %s17, 0
    %s20 = sadd.s32 %s19, 1
    %s21 = scalar_select %p18, %s19, %s20
    %p24 = pneg %p18
    %p25 = scmp.eq.s32.totalorder %s9, 1
    %p26 = por %p24, %p25
    %p27 = scmp.ne.s32.totalorder %s19, %s22
    %p28 = scmp.eq.s32.totalorder %s9, 0
    %p29 = por %p27, %p28
    %p30 = scmp.ne.s32.totalorder %s19, %s22
    %p31 = scmp.eq.s32.totalorder %s14, 1
    %p32 = por %p30, %p31
    %p33 = scmp.ne.s32.totalorder %s22, %s23
    %p34 = scmp.eq.s32.totalorder %s14, 0
    %p35 = por %p33, %p34
    %p36 = scmp.ne.s32.totalorder %s22, %s23
    %p37 = scmp.eq.s32.totalorder %s15, 1
    %p38 = por %p36, %p37
    %p40 = scmp.ne.s32.totalorder %s23, %s39
    %p41 = scmp.eq.s32.totalorder %s15, 0
    %p42 = por %p40, %p41
    %s43 = ssub.s32 %s9, %s16
    %p44 = scmp.eq.s32.totalorder %s43, 0
    %s46 = sadd.s32 %s45, 1
    %s47 = scalar_select %p44, %s45, %s46
    %p50 = pneg %p44
    %p51 = scmp.eq.s32.totalorder %s9, 1
    %p52 = por %p50, %p51
    %p53 = scmp.ne.s32.totalorder %s45, %s48
    %p54 = scmp.eq.s32.totalorder %s9, 0
    %p55 = por %p53, %p54
    %p56 = scmp.ne.s32.totalorder %s45, %s48
    %p57 = scmp.eq.s32.totalorder %s14, 1
    %p58 = por %p56, %p57
    %p59 = scmp.ne.s32.totalorder %s48, %s49
    %p60 = scmp.eq.s32.totalorder %s14, 0
    %p61 = por %p59, %p60
    %p62 = scmp.ne.s32.totalorder %s48, %s49
    %p63 = scmp.eq.s32.totalorder %s15, 1
    %p64 = por %p62, %p63
    %p66 = scmp.ne.s32.totalorder %s49, %s65
    %p67 = scmp.eq.s32.totalorder %s15, 0
    %p68 = por %p66, %p67
    %s69 = ssub.s32 %s9, %s16
    %p70 = scmp.eq.s32.totalorder %s69, 0
    %s72 = sadd.s32 %s71, 1
    %s73 = scalar_select %p70, %s71, %s72
    %p76 = pneg %p70
    %p77 = scmp.eq.s32.totalorder %s9, 1
    %p78 = por %p76, %p77
    %p79 = scmp.ne.s32.totalorder %s71, %s74
    %p80 = scmp.eq.s32.totalorder %s9, 0
    %p81 = por %p79, %p80
    %p82 = scmp.ne.s32.totalorder %s71, %s74
    %p83 = scmp.eq.s32.totalorder %s14, 1
    %p84 = por %p82, %p83
    %p85 = scmp.ne.s32.totalorder %s74, %s75
    %p86 = scmp.eq.s32.totalorder %s14, 0
    %p87 = por %p85, %p86
    %p88 = scmp.ne.s32.totalorder %s74, %s75
    %p89 = scmp.eq.s32.totalorder %s15, 1
    %p90 = por %p88, %p89
    %p92 = scmp.ne.s32.totalorder %s75, %s91
    %p93 = scmp.eq.s32.totalorder %s15, 0
    %p94 = por %p92, %p93
    %s95 = ssub.s32 %s9, %s16
    %p96 = scmp.eq.s32.totalorder %s95, 0
    %s98 = sadd.s32 %s97, 1
    %s99 = scalar_select %p96, %s97, %s98
    %p102 = pneg %p96
    %p103 = scmp.eq.s32.totalorder %s9, 1
    %p104 = por %p102, %p103
    %p105 = scmp.ne.s32.totalorder %s97, %s100
    %p106 = scmp.eq.s32.totalorder %s9, 0
    %p107 = por %p105, %p106
    %p108 = scmp.ne.s32.totalorder %s97, %s100
    %p109 = scmp.eq.s32.totalorder %s14, 1
    %p110 = por %p108, %p109
    %p111 = scmp.ne.s32.totalorder %s100, %s101
    %p112 = scmp.eq.s32.totalorder %s14, 0
    %p113 = por %p111, %p112
    %p114 = scmp.ne.s32.totalorder %s100, %s101
    %p115 = scmp.eq.s32.totalorder %s15, 1
    %p116 = por %p114, %p115
    %p118 = scmp.ne.s32.totalorder %s101, %s117
    %p119 = scmp.eq.s32.totalorder %s15, 0
    %p120 = por %p118, %p119
    %p121 = scmp.le.s32.totalorder 1, %s9
    %p122 = scmp.lt.s32.totalorder %s9, 3
    %p123 = pnand %p121, %p122
    %p124 = pneg %p123
    // Predicated region
    $region9: #{proposal_layer_forward.3} parent=5 // pred_check
      _
    $region10: #{proposal_layer_forward.3} parent=5 // pred_check_branch
      %126 = sbr.rel (%p123) target = $region12
    $region11: #{proposal_layer_forward.3} parent=5 // pred_region
      %s127 = ssub.s32 %s9, 1
    $region12: #{proposal_layer_forward.3} parent=5 // pred_fallthru
      _
    %p128 = scmp.lt.s32.totalorder %s9, 2
    // Predicated region
    $region13: #{proposal_layer_forward.3} parent=5 // pred_check
      %p129 = pneg %p128
    $region14: #{proposal_layer_forward.3} parent=5 // pred_check_branch
      %131 = sbr.rel (%p129) target = $region16
    $region15: #{proposal_layer_forward.3} parent=5 // pred_region
      // Predicated region
      $region17: #{proposal_layer_forward.3} parent=15 // pred_check
        %p132 = pneg %p29
      $region18: #{proposal_layer_forward.3} parent=15 // pred_check_branch
        %134 = sbr.rel (%p132) target = $region20
      $region19: #{proposal_layer_forward.3} parent=15 // pred_region
        %p135 = scmp.lt.s32.totalorder %s9, 1
        %s136 = scalar_select %p135, %s9, 1
        %s137 = smul.addr %s136, 2
        %s138 = smul.addr %s137, 4
        %s139 = scalar_lea.vmem %s0, %s138
      $region20: #{proposal_layer_forward.3} parent=15 // pred_fallthru
        _
      // Predicated region
      $region21: #{proposal_layer_forward.3} parent=15 // pred_check
        %p140 = pneg %p55
      $region22: #{proposal_layer_forward.3} parent=15 // pred_check_branch
        %142 = sbr.rel (%p140) target = $region24
      $region23: #{proposal_layer_forward.3} parent=15 // pred_region
        %p143 = scmp.lt.s32.totalorder %s9, 1
        %s144 = scalar_select %p143, %s9, 1
        %s145 = smul.addr %s144, 32
        %s146 = smul.addr %s145, 8
        %s147 = scalar_lea.vmem %s1, %s146
      $region24: #{proposal_layer_forward.3} parent=15 // pred_fallthru
        _
      // Predicated region
      $region25: #{proposal_layer_forward.3} parent=15 // pred_check
        %p148 = pneg %p81
      $region26: #{proposal_layer_forward.3} parent=15 // pred_check_branch
        %150 = sbr.rel (%p148) target = $region28
      $region27: #{proposal_layer_forward.3} parent=15 // pred_region
        %p151 = scmp.lt.s32.totalorder %s9, 1
        %s152 = scalar_select %p151, %s9, 1
        %s153 = smul.addr %s152, 16
        %s154 = smul.addr %s153, 8
        %s155 = scalar_lea.vmem %s2, %s154
      $region28: #{proposal_layer_forward.3} parent=15 // pred_fallthru
        _
    $region16: #{proposal_layer_forward.3} parent=5 // pred_fallthru
      _
    %p156 = scmp.le.s32.totalorder 1, %s9
    %p157 = scmp.lt.s32.totalorder %s9, 3
    %p158 = pnand %p156, %p157
    %p159 = pneg %p158
    // Predicated region
    $region29: #{proposal_layer_forward.3} parent=5 // pred_check
      _
    $region30: #{proposal_layer_forward.3} parent=5 // pred_check_branch
      %161 = sbr.rel (%p158) target = $region32
    $region31: #{proposal_layer_forward.3} parent=5 // pred_region
      %s162 = ssub.s32 %s9, 1
      %p163 = scmp.lt.s32.totalorder %s14, 1
      %s164 = scalar_select %p163, %s14, 1
      %s165 = smul.addr %s164, 2
      %s166 = smul.addr %s165, 4
      %s167 = scalar_lea.vmem %s0, %s166
      %p168 = pneg %p35
      %p169 = pneg %p32
      %p170 = scmp.lt.s32.totalorder %s14, 1
      %s171 = scalar_select %p170, %s14, 1
      %s172 = smul.addr %s171, 32
      %s173 = smul.addr %s172, 8
      %s174 = scalar_lea.vmem %s1, %s173
      %p175 = pneg %p61
      %p176 = pneg %p58
      %p177 = scmp.lt.s32.totalorder %s14, 1
      %s178 = scalar_select %p177, %s14, 1
      %s179 = smul.addr %s178, 16
      %s180 = smul.addr %s179, 8
      %s181 = scalar_lea.vmem %s2, %s180
      %p182 = pneg %p87
      %p183 = pneg %p84
      %p184 = pneg %p113
      %p185 = pneg %p110
      %p186 = scmp.lt.s32.totalorder %s14, 1
      %s187 = scalar_select %p186, %s14, 1
      %s188 = smul.addr %s187, 2
      %s189 = scalar_lea.vmem %s3, %s188
      %p190 = scmp.lt.s32.totalorder %s14, 1
      %s191 = scalar_select %p190, %s14, 1
      %s192 = smul.addr %s191, 2
      %s193 = smul.addr %s192, 4
      %s194 = scalar_lea.vmem %s0, %s193
      %p195 = scmp.lt.s32.totalorder %s14, 1
      %s196 = scalar_select %p195, %s14, 1
      %s197 = smul.addr %s196, 32
      %s198 = smul.addr %s197, 8
      %s199 = scalar_lea.vmem %s1, %s198
      %p200 = scmp.lt.s32.totalorder %s14, 1
      %s201 = scalar_select %p200, %s14, 1
      %s202 = smul.addr %s201, 16
      %s203 = smul.addr %s202, 8
      %s204 = scalar_lea.vmem %s2, %s203
      %p205 = scmp.lt.s32.totalorder %s14, 1
      %s206 = scalar_select %p205, %s14, 1
      %s207 = smul.addr %s206, 2
      %s208 = scalar_lea.vmem %s3, %s207
      %v209 = vld [vmem:[%s194] ss:$4 sm:$0x3]
      %s210 = scalar_lea.vmem %s194, 1
      %v211 = vld [vmem:[%s210] ss:$4 sm:$0x3]
      %s212 = scalar_lea.vmem %s194, 2
      %v213 = vld [vmem:[%s212] ss:$4 sm:$0x3]
      %s214 = scalar_lea.vmem %s194, 3
      %v215 = vld [vmem:[%s214] ss:$4 sm:$0x3]
      %v216 = vsub.f32 %v213, %v209
      %v217 = vadd.f32 %v216, 1.0
      %v218 = vsub.f32 %v215, %v211
      %v219 = vadd.f32 %v218, 1.0
      %v220 = vmul.f32 %v217, %v219
      %v221 = vlaneseq
      %v222 = vand.u32 %v221, 127
      %v223 = vadd.s32 %v222, 128
      %v224 = vlaneseq
      %v225 = vshrl.u32 %v224, 7
      %v226 = vsub.s32 %v222, %v225
      %v227 = vsub.s32 %v223, %v225
      loop: start=0, step=1, limit=32
      $region33: #{proposal_layer_forward.3} parent=31 // loop_pre_header
        _
      $region34: #{proposal_layer_forward.3} parent=31 // loop_header
        %s229 = sphi 0, %s233
        %p230 = scmp.ge.s32.totalorder %s229, 32
        %v234 = vphi 1.0, %v709
        %v235 = vphi 1.0, %v710
      $region35: #{proposal_layer_forward.3} parent=31 // loop_header_branch
        %232 = sbr.rel (%p230) target = $region39
      $region36: #{proposal_layer_forward.3} parent=31 // loop_body
        %s236 = smul.u32 %s229, 8
        %s237 = scalar_lea.vmem %s199, %s236
        %v238 = vld [vmem:[%s237] sm:$0xff]
        %240 = vrot.lane.b32.xlu0 %v238, 2
        %v241 = vpop.permute.xlu0 %240
        %v243 = vsub.f32 %v238, %v241
        %v244 = vadd.f32 %v243, 1.0
        %246 = vrot.lane.b32.xlu0 %v244, 127
        %v247 = vpop.permute.xlu0 %246
        %v249 = vmul.f32 %v244, %v247
        %250 = vset.pattern.permute.xlu0 0
        %251 = vperm.xlu0 %250, %v238
        %v252 = vpop.permute.xlu0 %251
        %v255 = vlaneseq
        %v256 = vshrl.u32 %v255, 7
        %v257 = vsub.s32 0, %v256
        %v258 = vrot.slane %v209, %v257
        %v259 = vlaneseq
        %v260 = vshrl.u32 %v259, 7
        %v261 = vsub.s32 1, %v260
        %v262 = vrot.slane %v209, %v261
        %v265 = vmax.f32 %v252, %v258
        %v266 = vmax.f32 %v252, %v262
        %267 = vset.pattern.permute.xlu0 1
        %268 = vperm.xlu0 %267, %v238
        %v269 = vpop.permute.xlu0 %268
        %v272 = vlaneseq
        %v273 = vshrl.u32 %v272, 7
        %v274 = vsub.s32 0, %v273
        %v275 = vrot.slane %v211, %v274
        %v276 = vlaneseq
        %v277 = vshrl.u32 %v276, 7
        %v278 = vsub.s32 1, %v277
        %v279 = vrot.slane %v211, %v278
        %v282 = vmax.f32 %v269, %v275
        %v283 = vmax.f32 %v269, %v279
        %284 = vset.pattern.permute.xlu0 2
        %285 = vperm.xlu0 %284, %v238
        %v286 = vpop.permute.xlu0 %285
        %v289 = vlaneseq
        %v290 = vshrl.u32 %v289, 7
        %v291 = vsub.s32 0, %v290
        %v292 = vrot.slane %v213, %v291
        %v293 = vlaneseq
        %v294 = vshrl.u32 %v293, 7
        %v295 = vsub.s32 1, %v294
        %v296 = vrot.slane %v213, %v295
        %v299 = vmin.f32 %v286, %v292
        %v300 = vmin.f32 %v286, %v296
        %301 = vset.pattern.permute.xlu0 3
        %302 = vperm.xlu0 %301, %v238
        %v303 = vpop.permute.xlu0 %302
        %v306 = vlaneseq
        %v307 = vshrl.u32 %v306, 7
        %v308 = vsub.s32 0, %v307
        %v309 = vrot.slane %v215, %v308
        %v310 = vlaneseq
        %v311 = vshrl.u32 %v310, 7
        %v312 = vsub.s32 1, %v311
        %v313 = vrot.slane %v215, %v312
        %v316 = vmin.f32 %v303, %v309
        %v317 = vmin.f32 %v303, %v313
        %v318 = vsub.f32 %v299, %v265
        %v319 = vsub.f32 %v300, %v266
        %v320 = vadd.f32 %v318, 1.0
        %v321 = vadd.f32 %v319, 1.0
        %v322 = vmax.f32 %v320, 0.0
        %v323 = vmax.f32 %v321, 0.0
        %v324 = vsub.f32 %v316, %v282
        %v325 = vsub.f32 %v317, %v283
        %v326 = vadd.f32 %v324, 1.0
        %v327 = vadd.f32 %v325, 1.0
        %v328 = vmax.f32 %v326, 0.0
        %v329 = vmax.f32 %v327, 0.0
        %v330 = vmul.f32 %v322, %v328
        %v331 = vmul.f32 %v323, %v329
        %333 = vset.pattern.permute.xlu0 2
        %334 = vperm.xlu0 %333, %v249
        %v335 = vpop.permute.xlu0 %334
        %v338 = vlaneseq
        %v339 = vshrl.u32 %v338, 7
        %v340 = vsub.s32 0, %v339
        %v341 = vrot.slane %v220, %v340
        %v342 = vlaneseq
        %v343 = vshrl.u32 %v342, 7
        %v344 = vsub.s32 1, %v343
        %v345 = vrot.slane %v220, %v344
        %v348 = vadd.f32 %v335, %v341
        %v349 = vadd.f32 %v335, %v345
        %v350 = vsub.f32 %v348, %v330
        %v351 = vsub.f32 %v349, %v331
        %v352 = vrcp.pop %v350
        %v353 = vrcp.pop %v351
        %v354 = vmul.f32 %v350, %v352
        %v355 = vmul.f32 %v351, %v353
        %v356 = vsub.f32 2.0, %v354
        %v357 = vsub.f32 2.0, %v355
        %v358 = vmul.f32 %v352, %v356
        %v359 = vmul.f32 %v353, %v357
        %v360 = vmul.f32 %v330, %v358
        %v361 = vmul.f32 %v331, %v359
        %s362 = scalar_lea.vmem %s204, %s229
        %v363 = vld [vmem:[%s362] sm:$0x1]
        %s364 = sadd.s32 %s229, 32
        %s365 = scalar_lea.vmem %s204, %s364
        %v366 = vld [vmem:[%s365] sm:$0x1]
        %s367 = sadd.s32 %s229, 64
        %s368 = scalar_lea.vmem %s204, %s367
        %v369 = vld [vmem:[%s368] sm:$0x1]
        %s370 = sadd.s32 %s229, 96
        %s371 = scalar_lea.vmem %s204, %s370
        %v372 = vld [vmem:[%s371] sm:$0x1]
        %v373 = vsub.f32 %v369, %v363
        %v374 = vadd.f32 %v373, 1.0
        %v375 = vsub.f32 %v372, %v366
        %v376 = vadd.f32 %v375, 1.0
        %v377 = vmul.f32 %v374, %v376
        %v378 = vlaneseq
        %v379 = vshrl.u32 %v378, 7
        %v380 = vsub.s32 0, %v379
        %v381 = vrot.slane %v363, %v380
        %v382 = vmax.f32 %v252, %v381
        %v383 = vlaneseq
        %v384 = vshrl.u32 %v383, 7
        %v385 = vsub.s32 0, %v384
        %v386 = vrot.slane %v366, %v385
        %v387 = vmax.f32 %v269, %v386
        %v388 = vlaneseq
        %v389 = vshrl.u32 %v388, 7
        %v390 = vsub.s32 0, %v389
        %v391 = vrot.slane %v369, %v390
        %v392 = vmin.f32 %v286, %v391
        %v393 = vlaneseq
        %v394 = vshrl.u32 %v393, 7
        %v395 = vsub.s32 0, %v394
        %v396 = vrot.slane %v372, %v395
        %v397 = vmin.f32 %v303, %v396
        %v398 = vsub.f32 %v392, %v382
        %v399 = vadd.f32 %v398, 1.0
        %v400 = vmax.f32 %v399, 0.0
        %v401 = vsub.f32 %v397, %v387
        %v402 = vadd.f32 %v401, 1.0
        %v403 = vmax.f32 %v402, 0.0
        %v404 = vmul.f32 %v400, %v403
        %v405 = vlaneseq
        %v406 = vshrl.u32 %v405, 7
        %v407 = vsub.s32 0, %v406
        %v408 = vrot.slane %v377, %v407
        %v409 = vadd.f32 %v335, %v408
        %v410 = vsub.f32 %v409, %v404
        %v411 = vrcp.pop %v410
        %v412 = vmul.f32 %v410, %v411
        %v413 = vsub.f32 2.0, %v412
        %v414 = vmul.f32 %v411, %v413
        %v415 = vmul.f32 %v404, %v414
        %v416 = vstv %s236
        %vm417 = vcmp.eq.s32.totalorder %v226, %v416
        %vm418 = vcmp.eq.s32.totalorder %v227, %v416
        %v419 = vlaneseq
        %v420 = vshrl.u32 %v419, 7
        %v421 = vsub.s32 0, %v420
        %v422 = vrot.slane %v234, %v421
        %v423 = vlaneseq
        %v424 = vshrl.u32 %v423, 7
        %v425 = vsub.s32 0, %v424
        %v426 = vrot.slane %v235, %v425
        %v427 = vsel %vm417, %v422, 0.0
        %v428 = vsel %vm418, %v426, 0.0
        %v429 = vadd.f32 %v427, %v428
        %430 = vadd.xlane.f32.xlu0 %v429
        %v431 = vpop.xlane.xlu0 %430
        %vm432 = vcmp.gt.f32.partialorder %v431, 0.5
        %vm433 = vcmp.gt.f32.partialorder %v360, 0.7
        %vm434 = vcmp.gt.f32.partialorder %v361, 0.7
        %vm435 = vcmp.gt.s32.totalorder %v222, %v416
        %vm436 = vcmp.gt.s32.totalorder %v223, %v416
        %vm437 = vmand %vm433, %vm435
        %vm438 = vmand %vm434, %vm436
        %v439 = vsel %vm432, 1, 0
        %vm440 = vcmp.eq.s32.totalorder %v439, 1
        %vm441 = vmand %vm437, %vm440
        %vm442 = vmand %vm438, %vm440
        %vm443 = vcmp.gt.f32.partialorder %v415, 0.7
        %vm444 = vcmp.gt.s32.totalorder %v225, 0
        %vm445 = vmand %vm443, %vm444
        %v446 = vlaneseq
        %v447 = vshrl.u32 %v446, 7
        %v448 = vsub.s32 0, %v447
        %v449 = vrot.slane %v439, %v448
        %vm450 = vcmp.eq.s32.totalorder %v449, 1
        %vm451 = vmand %vm445, %vm450
        %v452 = vsel %vm451, 0.0, %v431
        %vm453 = vcmp.gt.f32.partialorder %v452, 0.5
        %s454 = sadd.s32 %s236, 1
        %v455 = vstv %s454
        %vm456 = vcmp.gt.s32.totalorder %v222, %v455
        %vm457 = vcmp.gt.s32.totalorder %v223, %v455
        %vm458 = vmand %vm433, %vm456
        %vm459 = vmand %vm434, %vm457
        %v460 = vsel %vm453, 1, 0
        %461 = vset.pattern.permute.xlu0 0
        %462 = vperm.xlu0 %461, %v460
        %v463 = vpop.permute.xlu0 %462
        %vm464 = vcmp.eq.s32.totalorder %v463, 1
        %vm465 = vmand %vm458, %vm464
        %vm466 = vmand %vm459, %vm464
        %v467 = vsel %vm465, 1, 0
        %v468 = vsel %vm466, 1, 0
        %v469 = vrot.slane %v467, 1
        %v470 = vrot.slane %v468, 1
        %vm471 = vcmp.ne.s32.totalorder %v469, 0
        %vm472 = vcmp.ne.s32.totalorder %v470, 0
        %vm473 = vmor %vm441, %vm471
        %vm474 = vmor %vm442, %vm472
        %vm475 = vcmp.gt.s32.totalorder %v225, 1
        %vm476 = vmand %vm443, %vm475
        %v477 = vlaneseq
        %v478 = vshrl.u32 %v477, 7
        %v479 = vsub.s32 1, %v478
        %v480 = vrot.slane %v460, %v479
        %vm481 = vcmp.eq.s32.totalorder %v480, 1
        %v482 = vsel %vm481, 1, 0
        %483 = vrot.lane.b32.xlu0 %v482, 1
        %v484 = vpop.permute.xlu0 %483
        %vm485 = vcmp.ne.s32.totalorder %v484, 0
        %vm486 = vmand %vm476, %vm485
        %488 = vrot.lane.b32.xlu0 %v452, 1
        %v489 = vpop.permute.xlu0 %488
        %v491 = vsel %vm486, 0.0, %v489
        %vm492 = vcmp.gt.f32.partialorder %v491, 0.5
        %s493 = sadd.s32 %s236, 2
        %v494 = vstv %s493
        %vm495 = vcmp.gt.s32.totalorder %v222, %v494
        %vm496 = vcmp.gt.s32.totalorder %v223, %v494
        %vm497 = vmand %vm433, %vm495
        %vm498 = vmand %vm434, %vm496
        %v499 = vsel %vm492, 1, 0
        %500 = vset.pattern.permute.xlu0 1
        %501 = vperm.xlu0 %500, %v499
        %v502 = vpop.permute.xlu0 %501
        %vm503 = vcmp.eq.s32.totalorder %v502, 1
        %vm504 = vmand %vm497, %vm503
        %vm505 = vmand %vm498, %vm503
        %v506 = vsel %vm504, 1, 0
        %v507 = vsel %vm505, 1, 0
        %v508 = vrot.slane %v506, 2
        %v509 = vrot.slane %v507, 2
        %vm510 = vcmp.ne.s32.totalorder %v508, 0
        %vm511 = vcmp.ne.s32.totalorder %v509, 0
        %vm512 = vmor %vm473, %vm510
        %vm513 = vmor %vm474, %vm511
        %vm514 = vcmp.gt.s32.totalorder %v225, 2
        %vm515 = vmand %vm443, %vm514
        %v516 = vlaneseq
        %v517 = vshrl.u32 %v516, 7
        %v518 = vsub.s32 2, %v517
        %v519 = vrot.slane %v499, %v518
        %vm520 = vcmp.eq.s32.totalorder %v519, 1
        %v521 = vsel %vm520, 1, 0
        %522 = vrot.lane.b32.xlu0 %v521, 1
        %v523 = vpop.permute.xlu0 %522
        %vm524 = vcmp.ne.s32.totalorder %v523, 0
        %vm525 = vmand %vm515, %vm524
        %527 = vrot.lane.b32.xlu0 %v491, 1
        %v528 = vpop.permute.xlu0 %527
        %v530 = vsel %vm525, 0.0, %v528
        %vm531 = vcmp.gt.f32.partialorder %v530, 0.5
        %s532 = sadd.s32 %s236, 3
        %v533 = vstv %s532
        %vm534 = vcmp.gt.s32.totalorder %v222, %v533
        %vm535 = vcmp.gt.s32.totalorder %v223, %v533
        %vm536 = vmand %vm433, %vm534
        %vm537 = vmand %vm434, %vm535
        %v538 = vsel %vm531, 1, 0
        %539 = vset.pattern.permute.xlu0 2
        %540 = vperm.xlu0 %539, %v538
        %v541 = vpop.permute.xlu0 %540
        %vm542 = vcmp.eq.s32.totalorder %v541, 1
        %vm543 = vmand %vm536, %vm542
        %vm544 = vmand %vm537, %vm542
        %v545 = vsel %vm543, 1, 0
        %v546 = vsel %vm544, 1, 0
        %v547 = vrot.slane %v545, 3
        %v548 = vrot.slane %v546, 3
        %vm549 = vcmp.ne.s32.totalorder %v547, 0
        %vm550 = vcmp.ne.s32.totalorder %v548, 0
        %vm551 = vmor %vm512, %vm549
        %vm552 = vmor %vm513, %vm550
        %vm553 = vcmp.gt.s32.totalorder %v225, 3
        %vm554 = vmand %vm443, %vm553
        %v555 = vlaneseq
        %v556 = vshrl.u32 %v555, 7
        %v557 = vsub.s32 3, %v556
        %v558 = vrot.slane %v538, %v557
        %vm559 = vcmp.eq.s32.totalorder %v558, 1
        %v560 = vsel %vm559, 1, 0
        %561 = vrot.lane.b32.xlu0 %v560, 1
        %v562 = vpop.permute.xlu0 %561
        %vm563 = vcmp.ne.s32.totalorder %v562, 0
        %vm564 = vmand %vm554, %vm563
        %566 = vrot.lane.b32.xlu0 %v530, 1
        %v567 = vpop.permute.xlu0 %566
        %v569 = vsel %vm564, 0.0, %v567
        %vm570 = vcmp.gt.f32.partialorder %v569, 0.5
        %s571 = sadd.s32 %s236, 4
        %v572 = vstv %s571
        %vm573 = vcmp.gt.s32.totalorder %v222, %v572
        %vm574 = vcmp.gt.s32.totalorder %v223, %v572
        %vm575 = vmand %vm433, %vm573
        %vm576 = vmand %vm434, %vm574
        %v577 = vsel %vm570, 1, 0
        %578 = vset.pattern.permute.xlu0 3
        %579 = vperm.xlu0 %578, %v577
        %v580 = vpop.permute.xlu0 %579
        %vm581 = vcmp.eq.s32.totalorder %v580, 1
        %vm582 = vmand %vm575, %vm581
        %vm583 = vmand %vm576, %vm581
        %v584 = vsel %vm582, 1, 0
        %v585 = vsel %vm583, 1, 0
        %v586 = vrot.slane %v584, 4
        %v587 = vrot.slane %v585, 4
        %vm588 = vcmp.ne.s32.totalorder %v586, 0
        %vm589 = vcmp.ne.s32.totalorder %v587, 0
        %vm590 = vmor %vm551, %vm588
        %vm591 = vmor %vm552, %vm589
        %vm592 = vcmp.gt.s32.totalorder %v225, 4
        %vm593 = vmand %vm443, %vm592
        %v594 = vlaneseq
        %v595 = vshrl.u32 %v594, 7
        %v596 = vsub.s32 4, %v595
        %v597 = vrot.slane %v577, %v596
        %vm598 = vcmp.eq.s32.totalorder %v597, 1
        %v599 = vsel %vm598, 1, 0
        %600 = vrot.lane.b32.xlu0 %v599, 1
        %v601 = vpop.permute.xlu0 %600
        %vm602 = vcmp.ne.s32.totalorder %v601, 0
        %vm603 = vmand %vm593, %vm602
        %605 = vrot.lane.b32.xlu0 %v569, 1
        %v606 = vpop.permute.xlu0 %605
        %v608 = vsel %vm603, 0.0, %v606
        %vm609 = vcmp.gt.f32.partialorder %v608, 0.5
        %s610 = sadd.s32 %s236, 5
        %v611 = vstv %s610
        %vm612 = vcmp.gt.s32.totalorder %v222, %v611
        %vm613 = vcmp.gt.s32.totalorder %v223, %v611
        %vm614 = vmand %vm433, %vm612
        %vm615 = vmand %vm434, %vm613
        %v616 = vsel %vm609, 1, 0
        %617 = vset.pattern.permute.xlu0 4
        %618 = vperm.xlu0 %617, %v616
        %v619 = vpop.permute.xlu0 %618
        %vm620 = vcmp.eq.s32.totalorder %v619, 1
        %vm621 = vmand %vm614, %vm620
        %vm622 = vmand %vm615, %vm620
        %v623 = vsel %vm621, 1, 0
        %v624 = vsel %vm622, 1, 0
        %v625 = vrot.slane %v623, 5
        %v626 = vrot.slane %v624, 5
        %vm627 = vcmp.ne.s32.totalorder %v625, 0
        %vm628 = vcmp.ne.s32.totalorder %v626, 0
        %vm629 = vmor %vm590, %vm627
        %vm630 = vmor %vm591, %vm628
        %vm631 = vcmp.gt.s32.totalorder %v225, 5
        %vm632 = vmand %vm443, %vm631
        %v633 = vlaneseq
        %v634 = vshrl.u32 %v633, 7
        %v635 = vsub.s32 5, %v634
        %v636 = vrot.slane %v616, %v635
        %vm637 = vcmp.eq.s32.totalorder %v636, 1
        %v638 = vsel %vm637, 1, 0
        %639 = vrot.lane.b32.xlu0 %v638, 1
        %v640 = vpop.permute.xlu0 %639
        %vm641 = vcmp.ne.s32.totalorder %v640, 0
        %vm642 = vmand %vm632, %vm641
        %644 = vrot.lane.b32.xlu0 %v608, 1
        %v645 = vpop.permute.xlu0 %644
        %v647 = vsel %vm642, 0.0, %v645
        %vm648 = vcmp.gt.f32.partialorder %v647, 0.5
        %s649 = sadd.s32 %s236, 6
        %v650 = vstv %s649
        %vm651 = vcmp.gt.s32.totalorder %v222, %v650
        %vm652 = vcmp.gt.s32.totalorder %v223, %v650
        %vm653 = vmand %vm433, %vm651
        %vm654 = vmand %vm434, %vm652
        %v655 = vsel %vm648, 1, 0
        %656 = vset.pattern.permute.xlu0 5
        %657 = vperm.xlu0 %656, %v655
        %v658 = vpop.permute.xlu0 %657
        %vm659 = vcmp.eq.s32.totalorder %v658, 1
        %vm660 = vmand %vm653, %vm659
        %vm661 = vmand %vm654, %vm659
        %v662 = vsel %vm660, 1, 0
        %v663 = vsel %vm661, 1, 0
        %v664 = vrot.slane %v662, 6
        %v665 = vrot.slane %v663, 6
        %vm666 = vcmp.ne.s32.totalorder %v664, 0
        %vm667 = vcmp.ne.s32.totalorder %v665, 0
        %vm668 = vmor %vm629, %vm666
        %vm669 = vmor %vm630, %vm667
        %vm670 = vcmp.gt.s32.totalorder %v225, 6
        %vm671 = vmand %vm443, %vm670
        %v672 = vlaneseq
        %v673 = vshrl.u32 %v672, 7
        %v674 = vsub.s32 6, %v673
        %v675 = vrot.slane %v655, %v674
        %vm676 = vcmp.eq.s32.totalorder %v675, 1
        %v677 = vsel %vm676, 1, 0
        %678 = vrot.lane.b32.xlu0 %v677, 1
        %v679 = vpop.permute.xlu0 %678
        %vm680 = vcmp.ne.s32.totalorder %v679, 0
        %vm681 = vmand %vm671, %vm680
        %683 = vrot.lane.b32.xlu0 %v647, 1
        %v684 = vpop.permute.xlu0 %683
        %v686 = vsel %vm681, 0.0, %v684
        %vm687 = vcmp.gt.f32.partialorder %v686, 0.5
        %s688 = sadd.s32 %s236, 7
        %v689 = vstv %s688
        %vm690 = vcmp.gt.s32.totalorder %v222, %v689
        %vm691 = vcmp.gt.s32.totalorder %v223, %v689
        %vm692 = vmand %vm433, %vm690
        %vm693 = vmand %vm434, %vm691
        %v694 = vsel %vm687, 1, 0
        %695 = vset.pattern.permute.xlu0 6
        %696 = vperm.xlu0 %695, %v694
        %v697 = vpop.permute.xlu0 %696
        %vm698 = vcmp.eq.s32.totalorder %v697, 1
        %vm699 = vmand %vm692, %vm698
        %vm700 = vmand %vm693, %vm698
        %v701 = vsel %vm699, 1, 0
        %v702 = vsel %vm700, 1, 0
        %v703 = vrot.slane %v701, 7
        %v704 = vrot.slane %v702, 7
        %vm705 = vcmp.ne.s32.totalorder %v703, 0
        %vm706 = vcmp.ne.s32.totalorder %v704, 0
        %vm707 = vmor %vm668, %vm705
        %vm708 = vmor %vm669, %vm706
        %v709 = vsel %vm707, 0.0, %v234
        %v710 = vsel %vm708, 0.0, %v235
      $region37: #{proposal_layer_forward.3} parent=31 // loop_footer
        %s233 = sadd.s32 1, %s229
      $region38: #{proposal_layer_forward.3} parent=31 // loop_footer_branch
        %228 = sbr.rel target = $region34
      $region39: #{proposal_layer_forward.3} parent=31 // loop_exit
        _
      %v713 = vcombine.low %v234, %v235
      %v715 = vunpack.c.l.s4 1966171168
      %v716 = vunpack.c.0.s8 %v715
      %v717 = vlaneseq
      %v718 = vshrl.u32 %v717, 7
      %v719 = vsub.s32 %v716, %v718
      %v720 = vrot.slane %v713, %v719
      %v722 = vunpack.c.l.s4 1966171168
      %v723 = vunpack.c.0.s8 %v722
      %v724 = vlaneseq
      %v725 = vshrl.u32 %v724, 7
      %v726 = vsub.s32 %v723, %v725
      %v727 = vrot.slane %v720, %v726
      %v729 = vlaneseq
      %vm730 = vcmp.ge.s32.totalorder %v729, 0
      %vm731 = vcmp.lt.s32.totalorder %v729, 256
      %vm732 = vmand %vm730, %vm731
      %733 = vst.msk [vmem:[%s208] sm:$0x3] %vm732, %v727
      %p734 = scmp.lt.s32.totalorder %s14, 1
      %s735 = scalar_select %p734, %s14, 1
      %s736 = smul.addr %s735, 2
      %s737 = scalar_lea.vmem %s3, %s736
      // Predicated region
      $region40: #{proposal_layer_forward.3} parent=31 // pred_check
        %p738 = pneg %p110
      $region41: #{proposal_layer_forward.3} parent=31 // pred_check_branch
        %740 = sbr.rel (%p738) target = $region43
      $region42: #{proposal_layer_forward.3} parent=31 // pred_region
        _
      $region43: #{proposal_layer_forward.3} parent=31 // pred_fallthru
        _
    $region32: #{proposal_layer_forward.3} parent=5 // pred_fallthru
      _
    %p741 = scmp.le.s32.totalorder 2, %s9
    // Predicated region
    $region44: #{proposal_layer_forward.3} parent=5 // pred_check
      %p742 = pneg %p741
    $region45: #{proposal_layer_forward.3} parent=5 // pred_check_branch
      %744 = sbr.rel (%p742) target = $region47
    $region46: #{proposal_layer_forward.3} parent=5 // pred_region
      %s745 = ssub.s32 %s9, 2
      // Predicated region
      $region48: #{proposal_layer_forward.3} parent=46 // pred_check
        %p746 = pneg %p116
      $region49: #{proposal_layer_forward.3} parent=46 // pred_check_branch
        %748 = sbr.rel (%p746) target = $region51
      $region50: #{proposal_layer_forward.3} parent=46 // pred_region
        %p749 = scmp.lt.s32.totalorder %s15, 1
        %s750 = scalar_select %p749, %s15, 1
        %s751 = smul.addr %s750, 2
        %s752 = scalar_lea.vmem %s3, %s751
      $region51: #{proposal_layer_forward.3} parent=46 // pred_fallthru
        _
    $region47: #{proposal_layer_forward.3} parent=5 // pred_fallthru
      _
  $region6: #{proposal_layer_forward.3} parent=0 // loop_footer
    %s13 = sadd.s32 1, %s9
  $region7: #{proposal_layer_forward.3} parent=0 // loop_footer_branch
    %8 = sbr.rel target = $region3
  $region8: #{proposal_layer_forward.3} parent=0 // loop_exit
    _

</llo_original>
